<compile_context>
chip_gen: v5e
topology: v5e:2x2
jax: 0.10.0
libtpu: 0.0.40
codegen_flags: <defaults>
</compile_context>

<pallas_src>
import numpy as np
import jax
import jax.numpy as jnp
from jax import lax
from jax.experimental import pallas as pl
from jax.experimental.pallas import tpu as pltpu

HIDDEN = 256
BN_EPS = 1e-5


def _round_up(a, b):
    return ((a + b - 1) // b) * b


def _largest_divisor_leq(n, cap):
    for d in range(min(n, cap), 0, -1):
        if n % d == 0:
            return d
    return 1


# ----------------------------------------------------------------------------
# Pallas kernel: SharedMLP (conv1x1 + folded BN + ReLU) x2  +  running max pool
# grid = (B, M_pad // T, S // S_chunk);  last axis is the pooling reduction.
# ----------------------------------------------------------------------------
def _crr_mlp_kernel(x_ref, w1_ref, b1_ref, w2_ref, b2_ref, o_ref, acc_ref):
    s = pl.program_id(2)
    _, S_chunk, T, Cpad = x_ref.shape          # (1, S_chunk, T, Cpad) bf16
    H = acc_ref.shape[1]                       # 256

    # (S_chunk, T) merge is layout-preserving (T % 8 == 0).
    x = x_ref[...].reshape(S_chunk * T, Cpad)

    # layer 1: 1x1 conv (BN scale folded into w1) + bias + ReLU, f32 in-register,
    # cast to bf16 before it can be materialized (halves intermediate bytes).
    h = jnp.dot(x, w1_ref[...], preferred_element_type=jnp.float32)
    h = jnp.maximum(h + b1_ref[...], 0.0).astype(jnp.bfloat16)

    # layer 2: 1x1 conv + bias + ReLU (bf16 operands, f32 accumulation).
    h = jnp.dot(h, w2_ref[...], preferred_element_type=jnp.float32)
    h = jnp.maximum(h + b2_ref[...], 0.0)      # (S_chunk*T, 256) f32

    # slab-wise max over the chunk's samples: pure VPU (no cross-sublane reduce).
    chunk_max = jnp.max(h.reshape(S_chunk, T, H), axis=0)

    @pl.when(s == 0)
    def _():
        acc_ref[...] = jnp.zeros_like(acc_ref)     # valid: values are post-ReLU

    acc_ref[...] = jnp.maximum(acc_ref[...], chunk_max)

    @pl.when(s == pl.num_programs(2) - 1)
    def _():
        # emit the transposed tile directly -> output is already (B, 256, M).
        o_ref[...] = jnp.transpose(acc_ref[...])[None, :, :]


def crr_mlp_maxpool(grouped_sm, w1, s1, b1, w2, s2, b2, *,
                    seed_tile=256, s_chunk_cap=16):
    """grouped_sm: (B, S, M, Cin) sample-major, channels-last -> (B, 256, M)."""
    B, S, M, Cin = grouped_sm.shape
    Cpad = _round_up(Cin, 8)           # last dim == full array dim -> (8,128) ok

    # Per-batch seed tiling.  Output lane dim must be a multiple of 128 or the
    # full dim, so either T == M_pad (small problems) or T is 128-aligned.
    if M <= seed_tile:
        T = _round_up(M, 8)
        M_pad = T
    else:
        T = _round_up(seed_tile, 128)
        M_pad = _round_up(M, T)
    S_chunk = _largest_divisor_leq(S, s_chunk_cap)

    # bf16 input slab, single jnp.pad (zero tail rows are sliced off below;
    # zero channel columns meet zero weight rows).
    x = grouped_sm.astype(jnp.bfloat16)
    x = jnp.pad(x, ((0, 0), (0, 0), (0, M_pad - M), (0, Cpad - Cin)))

    # Fold the eval-mode BN scale into the weights (trace time); biases stay f32.
    w1f = jnp.pad(w1 * s1[None, :], ((0, Cpad - Cin), (0, 0))).astype(jnp.bfloat16)
    w2f = (w2 * s2[None, :]).astype(jnp.bfloat16)
    b1r = b1.reshape(1, HIDDEN).astype(jnp.float32)
    b2r = b2.reshape(1, HIDDEN).astype(jnp.float32)

    out = pl.pallas_call(
        _crr_mlp_kernel,
        out_shape=jax.ShapeDtypeStruct((B, HIDDEN, M_pad), jnp.float32),
        grid_spec=pltpu.PrefetchScalarGridSpec(
            num_scalar_prefetch=0,
            grid=(B, M_pad // T, S // S_chunk),
            in_specs=[
                pl.BlockSpec((1, S_chunk, T, Cpad), lambda b, i, s: (b, s, i, 0)),
                pl.BlockSpec((Cpad, HIDDEN), lambda b, i, s: (0, 0)),    # w1 (scaled)
                pl.BlockSpec((1, HIDDEN), lambda b, i, s: (0, 0)),       # bn1 bias
                pl.BlockSpec((HIDDEN, HIDDEN), lambda b, i, s: (0, 0)),  # w2 (scaled)
                pl.BlockSpec((1, HIDDEN), lambda b, i, s: (0, 0)),       # bn2 bias
            ],
            out_specs=pl.BlockSpec((1, HIDDEN, T), lambda b, i, s: (b, 0, i)),
            scratch_shapes=[pltpu.VMEM((T, HIDDEN), jnp.float32)],       # running max
        ),
        compiler_params=pltpu.CompilerParams(
            # B and the M-tile axes are parallel (megacore split on v7x);
            # the S-chunk reduction axis is innermost and arbitrary.
            dimension_semantics=("parallel", "parallel", "arbitrary"),
            # <= 48 MiB: headroom on v7x's 64 MiB, larger-than-default tiles on
            # v5e/v6e's 128 MiB.
            vmem_limit_bytes=48 * 1024 * 1024,
        ),
    )(x, w1f, b1r, w2f, b2r)
    return out[:, :, :M]                                   # (B, 256, M)


# ----------------------------------------------------------------------------
# JAX glue: CylinderQueryAndGroup (data-dependent gather, kept outside Pallas)
# ----------------------------------------------------------------------------
def _gather_points(points, idx):
    # points: (B, N, D), idx: (B, S, M) -> (B, S, M, D)
    return jax.vmap(lambda p, i: p[i])(points, idx)


def cylinder_query_and_group(xyz, new_xyz, rot, features,
                             radius, hmin, hmax, nsample):
    """Replicates CylinderQueryAndGroup(use_xyz=True, normalize_xyz=True,
    rotate_xyz=True).  Returns grouped features SAMPLE-MAJOR, channels-last:
    (B, nsample, npoint, 3 + C)."""
    B, N, _ = xyz.shape
    # TODO(synk): (B, M, N, 3) temporary; fuse into the kernel for large N.
    diff = xyz[:, None, :, :] - new_xyz[:, :, None, :]            # (B, M, N, 3)
    local = jnp.einsum('bmnd,bmde->bmne', diff, rot)              # diff @ rot
    x_rot, y_rot, z_rot = local[..., 0], local[..., 1], local[..., 2]
    d2 = y_rot * y_rot + z_rot * z_rot
    mask = (d2 < radius * radius) & (x_rot > hmin) & (x_rot < hmax)  # (B, M, N)

    # first `nsample` matching indices in ascending order; slots beyond the
    # match count are filled with the first match (0 if no match) -- same
    # semantics as the CUDA cylinder_query kernel.  top_k over the negated
    # candidates replaces the previous full jnp.sort over N.
    cand = jnp.where(mask, jnp.arange(N, dtype=jnp.int32)[None, None, :], N)
    neg_smallest, _ = lax.top_k(-cand, nsample)                   # (B, M, S)
    idx = -neg_smallest
    first = idx[..., :1]
    fill = jnp.where(first < N, first, 0)
    idx = jnp.where(idx < N, idx, fill)                           # (B, M, S)

    idx_sm = jnp.transpose(idx, (0, 2, 1))                        # (B, S, M)
    grouped_xyz = _gather_points(xyz, idx_sm) - new_xyz[:, None, :, :]  # (B,S,M,3)
    grouped_xyz = jnp.einsum('bsmd,bmde->bsme', grouped_xyz, rot)       # rotate
    grouped_xyz = grouped_xyz / radius                                  # normalize

    feats_nl = jnp.transpose(features, (0, 2, 1))                 # (B, N, C)
    grouped_feat = _gather_points(feats_nl, idx_sm)               # (B, S, M, C)
    return jnp.concatenate([grouped_xyz, grouped_feat], axis=-1)  # (B, S, M, 3+C)


# ----------------------------------------------------------------------------
# Parameters (deterministic, synthetic)
# ----------------------------------------------------------------------------
def init_crr_params(key, feat_channel):
    cin = 3 + feat_channel
    ks = jax.random.split(key, 6)
    w1 = jax.random.normal(ks[0], (cin, HIDDEN), jnp.float32) / jnp.sqrt(cin)
    w2 = jax.random.normal(ks[1], (HIDDEN, HIDDEN), jnp.float32) / jnp.sqrt(HIDDEN)
    g1 = jax.random.uniform(ks[2], (HIDDEN,), minval=0.8, maxval=1.2)
    b1 = jax.random.normal(ks[3], (HIDDEN,), jnp.float32) * 0.1
    g2 = jax.random.uniform(ks[4], (HIDDEN,), minval=0.8, maxval=1.2)
    b2 = jax.random.normal(ks[5], (HIDDEN,), jnp.float32) * 0.1
    # fold eval-mode BN (fresh running stats: mean=0, var=1) into scale/bias
    rm, rv = jnp.zeros((HIDDEN,)), jnp.ones((HIDDEN,))
    s1 = g1 / jnp.sqrt(rv + BN_EPS)
    bb1 = b1 - rm * s1
    s2 = g2 / jnp.sqrt(rv + BN_EPS)
    bb2 = b2 - rm * s2
    return (w1, s1, bb1, w2, s2, bb2)


# ----------------------------------------------------------------------------
# Full CRR forward
# ----------------------------------------------------------------------------
def crr_forward(seed_xyz, seed_features, vp_rot, params, *,
                nsample, radius=0.05, hmin=-0.02, hmax=0.04):
    grouped = cylinder_query_and_group(seed_xyz, seed_xyz, vp_rot, seed_features,
                                       radius, hmin, hmax, nsample)  # (B,S,M,3+C)
    # kernel already emits (B, 256, M): no trailing XLA transpose.
    return crr_mlp_maxpool(grouped, *params)


def _ref_mlp_maxpool(grouped_sm, w1, s1, b1, w2, s2, b2):
    # Pure-JAX reference of the MLP + max-pool path using the SAME precision
    # pipeline as the kernel (bf16 operands, f32 accumulation, folded BN).
    w1f = (w1 * s1[None, :]).astype(jnp.bfloat16)
    w2f = (w2 * s2[None, :]).astype(jnp.bfloat16)
    xb = grouped_sm.astype(jnp.bfloat16)
    h = jnp.einsum('bsmc,ch->bsmh', xb, w1f, preferred_element_type=jnp.float32)
    h = jnp.maximum(h + b1, 0.0).astype(jnp.bfloat16)
    h = jnp.einsum('bsmh,hk->bsmk', h, w2f, preferred_element_type=jnp.float32)
    h = jnp.maximum(h + b2, 0.0)
    return jnp.transpose(jnp.max(h, axis=1), (0, 2, 1))           # (B, 256, M)


if __name__ == "__main__":
    B, num_seed, feat_channel, nsample = 2, 16, 4, 16
    radius, hmin, hmax = 0.05, -0.02, 0.04

    key = jax.random.PRNGKey(0)
    kx, kf, kr, kw = jax.random.split(key, 4)
    seed_xyz = jax.random.uniform(kx, (B, num_seed, 3), jnp.float32,
                                  minval=0.0, maxval=0.08)
    seed_feat = jax.random.normal(kf, (B, feat_channel, num_seed), jnp.float32)
    # deterministic per-seed rotation matrices (QR of random normals)
    q, r = jnp.linalg.qr(jax.random.normal(kr, (B, num_seed, 3, 3), jnp.float32))
    vp_rot = q * jnp.sign(jnp.diagonal(r, axis1=-2, axis2=-1))[..., None, :]

    params = init_crr_params(kw, feat_channel)

    out = crr_forward(seed_xyz, seed_feat, vp_rot, params,
                      nsample=nsample, radius=radius, hmin=hmin, hmax=hmax)
    out = jax.block_until_ready(out)
    assert out.shape == (B, HIDDEN, num_seed), out.shape

    # sanity check against a pure-JAX reference of the MLP + max-pool path
    grouped = cylinder_query_and_group(seed_xyz, seed_xyz, vp_rot, seed_feat,
                                       radius, hmin, hmax, nsample)
    ref = jax.block_until_ready(_ref_mlp_maxpool(grouped, *params))
    np.testing.assert_allclose(np.asarray(out), np.asarray(ref),
                               rtol=2e-3, atol=2e-3)

    print("KERNEL_OK")
</pallas_src>

<mosaic_0001>
module attributes {stable_mosaic.version = 11 : i64} {
  func.func @_crr_mlp_kernel(%arg0: i32, %arg1: i32, %arg2: i32, %arg3: memref<1x16x16x8xbf16, #tpu.memory_space<vmem>>, %arg4: memref<8x256xbf16, #tpu.memory_space<vmem>>, %arg5: memref<1x256xf32, #tpu.memory_space<vmem>>, %arg6: memref<256x256xbf16, #tpu.memory_space<vmem>>, %arg7: memref<1x256xf32, #tpu.memory_space<vmem>>, %arg8: memref<1x256x16xf32, #tpu.memory_space<vmem>>, %arg9: memref<16x256xf32, #tpu.memory_space<vmem>>) attributes {dimension_semantics = [#tpu.dimension_semantics<parallel>, #tpu.dimension_semantics<parallel>, #tpu.dimension_semantics<arbitrary>], iteration_bounds = array<i64: 2, 1, 1>, scalar_prefetch = 0 : i64, scratch_operands = 1 : i64, tpu.core_type = #tpu.core_type<tc>, window_params = [{transform_indices = @transform_0, window_bounds = array<i64: 1, 16, 16, 8>}, {pipeline_mode = #tpu.pipeline_mode<synchronous>, transform_indices = @transform_1, window_bounds = array<i64: 8, 256>}, {pipeline_mode = #tpu.pipeline_mode<synchronous>, transform_indices = @transform_2, window_bounds = array<i64: 1, 256>}, {pipeline_mode = #tpu.pipeline_mode<synchronous>, transform_indices = @transform_3, window_bounds = array<i64: 256, 256>}, {pipeline_mode = #tpu.pipeline_mode<synchronous>, transform_indices = @transform_4, window_bounds = array<i64: 1, 256>}, {transform_indices = @transform_5, window_bounds = array<i64: 1, 256, 16>}]} {
    %c0 = arith.constant 0 : index
    %c0_0 = arith.constant 0 : index
    %c0_1 = arith.constant 0 : index
    %c0_2 = arith.constant 0 : index
    %0 = vector.load %arg3[%c0, %c0_0, %c0_1, %c0_2] : memref<1x16x16x8xbf16, #tpu.memory_space<vmem>>, vector<1x16x16x8xbf16>
    %1 = vector.shape_cast %0 : vector<1x16x16x8xbf16> to vector<256x8xbf16>
    %c0_3 = arith.constant 0 : index
    %c0_4 = arith.constant 0 : index
    %2 = vector.load %arg4[%c0_3, %c0_4] : memref<8x256xbf16, #tpu.memory_space<vmem>>, vector<8x256xbf16>
    %cst = arith.constant dense<0.000000e+00> : vector<256x256xf32>
    %3 = tpu.matmul %1, %2, %cst {dimension_numbers = #tpu.dot_dimension_numbers<[1], [0], [0], [1], [0, 0, 1, 1], [], []>} : vector<256x8xbf16>, vector<8x256xbf16>, vector<256x256xf32> -> vector<256x256xf32>
    %c0_5 = arith.constant 0 : index
    %c0_6 = arith.constant 0 : index
    %4 = vector.load %arg5[%c0_5, %c0_6] : memref<1x256xf32, #tpu.memory_space<vmem>>, vector<1x256xf32>
    %5 = vector.broadcast %4 : vector<1x256xf32> to vector<256x256xf32>
    %6 = arith.addf %3, %5 : vector<256x256xf32>
    %cst_7 = arith.constant 0.000000e+00 : f32
    %7 = vector.broadcast %cst_7 : f32 to vector<256x256xf32>
    %8 = arith.maximumf %6, %7 : vector<256x256xf32>
    %9 = arith.truncf %8 : vector<256x256xf32> to vector<256x256xbf16>
    %c0_8 = arith.constant 0 : index
    %c0_9 = arith.constant 0 : index
    %10 = vector.load %arg6[%c0_8, %c0_9] : memref<256x256xbf16, #tpu.memory_space<vmem>>, vector<256x256xbf16>
    %cst_10 = arith.constant dense<0.000000e+00> : vector<256x256xf32>
    %11 = tpu.matmul %9, %10, %cst_10 {dimension_numbers = #tpu.dot_dimension_numbers<[1], [0], [0], [1], [0, 0, 1, 1], [], []>} : vector<256x256xbf16>, vector<256x256xbf16>, vector<256x256xf32> -> vector<256x256xf32>
    %c0_11 = arith.constant 0 : index
    %c0_12 = arith.constant 0 : index
    %12 = vector.load %arg7[%c0_11, %c0_12] : memref<1x256xf32, #tpu.memory_space<vmem>>, vector<1x256xf32>
    %13 = vector.broadcast %12 : vector<1x256xf32> to vector<256x256xf32>
    %14 = arith.addf %11, %13 : vector<256x256xf32>
    %cst_13 = arith.constant 0.000000e+00 : f32
    %15 = vector.broadcast %cst_13 : f32 to vector<256x256xf32>
    %16 = arith.maximumf %14, %15 : vector<256x256xf32>
    %17 = vector.shape_cast %16 : vector<256x256xf32> to vector<16x16x256xf32>
    %cst_14 = arith.constant dense<0xFF800000> : vector<16x256xf32>
    %18 = vector.multi_reduction <maximumf>, %17, %cst_14 [0] : vector<16x16x256xf32> to vector<16x256xf32>
    %c0_i32 = arith.constant 0 : i32
    %19 = arith.cmpi eq, %arg2, %c0_i32 : i32
    %20 = arith.extui %19 : i1 to i32
    %c0_i32_15 = arith.constant 0 : i32
    %21 = arith.cmpi ne, %20, %c0_i32_15 : i32
    scf.if %21 {
      %cst_22 = arith.constant 0.000000e+00 : f32
      %28 = vector.broadcast %cst_22 : f32 to vector<16x256xf32>
      %c0_23 = arith.constant 0 : index
      %c0_24 = arith.constant 0 : index
      %29 = vector.load %arg9[%c0_23, %c0_24] : memref<16x256xf32, #tpu.memory_space<vmem>>, vector<16x256xf32>
      tpu.vector_store %arg9[%c0_23, %c0_24], %28 {strides = array<i32>} : memref<16x256xf32, #tpu.memory_space<vmem>>, vector<16x256xf32>,
    } else {
    }
    %c0_16 = arith.constant 0 : index
    %c0_17 = arith.constant 0 : index
    %22 = vector.load %arg9[%c0_16, %c0_17] : memref<16x256xf32, #tpu.memory_space<vmem>>, vector<16x256xf32>
    %23 = arith.maximumf %22, %18 : vector<16x256xf32>
    %c0_18 = arith.constant 0 : index
    %c0_19 = arith.constant 0 : index
    %24 = vector.load %arg9[%c0_18, %c0_19] : memref<16x256xf32, #tpu.memory_space<vmem>>, vector<16x256xf32>
    tpu.vector_store %arg9[%c0_18, %c0_19], %23 {strides = array<i32>} : memref<16x256xf32, #tpu.memory_space<vmem>>, vector<16x256xf32>,
    %c0_i32_20 = arith.constant 0 : i32
    %25 = arith.cmpi eq, %arg2, %c0_i32_20 : i32
    %26 = arith.extui %25 : i1 to i32
    %c0_i32_21 = arith.constant 0 : i32
    %27 = arith.cmpi ne, %26, %c0_i32_21 : i32
    scf.if %27 {
      %c0_22 = arith.constant 0 : index
      %c0_23 = arith.constant 0 : index
      %28 = vector.load %arg9[%c0_22, %c0_23] : memref<16x256xf32, #tpu.memory_space<vmem>>, vector<16x256xf32>
      %29 = tpu.transpose %28, [1, 0] : vector<16x256xf32> -> vector<256x16xf32>
      %30 = vector.shape_cast %29 : vector<256x16xf32> to vector<1x256x16xf32>
      %c0_24 = arith.constant 0 : index
      %c0_25 = arith.constant 0 : index
      %c0_26 = arith.constant 0 : index
      %31 = vector.load %arg8[%c0_24, %c0_25, %c0_26] : memref<1x256x16xf32, #tpu.memory_space<vmem>>, vector<1x256x16xf32>
      tpu.vector_store %arg8[%c0_24, %c0_25, %c0_26], %30 {strides = array<i32>} : memref<1x256x16xf32, #tpu.memory_space<vmem>>, vector<1x256x16xf32>,
    } else {
    }
    return
  }
  func.func @transform_0(%arg0: i32, %arg1: i32, %arg2: i32) -> (i32, i32, i32, i32) {
    %c0_i32 = arith.constant 0 : i32
    %c0_i32_0 = arith.constant 0 : i32
    return %arg0, %arg2, %arg1, %c0_i32 : i32, i32, i32, i32
  }
  func.func @transform_1(%arg0: i32, %arg1: i32, %arg2: i32) -> (i32, i32) {
    %c0_i32 = arith.constant 0 : i32
    %c0_i32_0 = arith.constant 0 : i32
    %c0_i32_1 = arith.constant 0 : i32
    return %c0_i32, %c0_i32_0 : i32, i32
  }
  func.func @transform_2(%arg0: i32, %arg1: i32, %arg2: i32) -> (i32, i32) {
    %c0_i32 = arith.constant 0 : i32
    %c0_i32_0 = arith.constant 0 : i32
    %c0_i32_1 = arith.constant 0 : i32
    return %c0_i32, %c0_i32_0 : i32, i32
  }
  func.func @transform_3(%arg0: i32, %arg1: i32, %arg2: i32) -> (i32, i32) {
    %c0_i32 = arith.constant 0 : i32
    %c0_i32_0 = arith.constant 0 : i32
    %c0_i32_1 = arith.constant 0 : i32
    return %c0_i32, %c0_i32_0 : i32, i32
  }
  func.func @transform_4(%arg0: i32, %arg1: i32, %arg2: i32) -> (i32, i32) {
    %c0_i32 = arith.constant 0 : i32
    %c0_i32_0 = arith.constant 0 : i32
    %c0_i32_1 = arith.constant 0 : i32
    return %c0_i32, %c0_i32_0 : i32, i32
  }
  func.func @transform_5(%arg0: i32, %arg1: i32, %arg2: i32) -> (i32, i32, i32) {
    %c0_i32 = arith.constant 0 : i32
    %c0_i32_0 = arith.constant 0 : i32
    return %arg0, %c0_i32, %arg1 : i32, i32, i32
  }
}

</mosaic_0001>

<llo_original>
// kernel: tpu_custom_call.1
$region0: #{tpu_custom_call.1}
  #allocation0 [shape = 'u32[]', space=smem, size = 0x4, offset = 0x4, fixed_abs, tag = 'smem constant byte address 0x4 - core index']
  #allocation1 [shape = 'u32[72,128]{1,0:T(1,128)}', space=vmem, size = 0x9000, scoped, tag = 'internal scratch']
  #allocation2 [shape = 'f32[16,256]{1,0:T(8,128)}', space=vmem, size = 0x4000, scoped, tag = 'scratch operand']
  %s0 = inlined_call_operand.vmem [shape: bf16[2,16,16,8], index: 0, kind: input, shape index: {}]
  %s1 = inlined_call_operand.vmem [shape: bf16[8,256], index: 1, kind: input, shape index: {}]
  %s2 = inlined_call_operand.vmem [shape: f32[1,256], index: 2, kind: input, shape index: {}]
  %s3 = inlined_call_operand.vmem [shape: bf16[256,256], index: 3, kind: input, shape index: {}]
  %s4 = inlined_call_operand.vmem [shape: f32[1,256], index: 4, kind: input, shape index: {}]
  %s5 = inlined_call_operand.vmem [shape: f32[2,256,16], index: 5, kind: output, shape index: {}]
  %s6 = sld [smem:[#allocation0]]
  $region61: #{tpu_custom_call.1} parent=0
    _
  %s8 = ssub.s32 1, %s6
  %s9 = scalar_select 0, %s8, %s6
  loop: start=0, step=1, limit=4
  $region2: #{tpu_custom_call.1} parent=0 // loop_pre_header
    _
  $region3: #{tpu_custom_call.1} parent=0 // loop_header
    %s11 = sphi 0, %s15
    %p12 = scmp.ge.s32.totalorder %s11, 4
    %s18 = sphi 0, %s37
    %s19 = sphi 0, %s33
    %s20 = sphi 0, %s29
    %s21 = sphi 0, %s18
    %s22 = sphi 0, %s19
    %s23 = sphi 0, %s20
    %s24 = sphi 0, %s21
    %s25 = sphi 0, %s22
    %s26 = sphi 0, %s23
    %s44 = sphi 0, %s46
    %s47 = sphi 0, %s44
    %s48 = sphi 0, %s47
    %s64 = sphi 0, %s48
    %s68 = sphi 0, %s68
    %s70 = sphi 0, %s68
    %s71 = sphi 0, %s70
    %s85 = sphi 0, %s71
    %s89 = sphi 0, %s89
    %s91 = sphi 0, %s89
    %s92 = sphi 0, %s91
    %s106 = sphi 0, %s92
    %s110 = sphi 0, %s110
    %s112 = sphi 0, %s110
    %s113 = sphi 0, %s112
    %s127 = sphi 0, %s113
    %s131 = sphi 0, %s131
    %s133 = sphi 0, %s131
    %s134 = sphi 0, %s133
    %s148 = sphi 0, %s134
    %s156 = sphi 0, %s158
    %s159 = sphi 0, %s156
    %s160 = sphi 0, %s159
    %s176 = sphi 0, %s160
  $region4: #{tpu_custom_call.1} parent=0 // loop_header_branch
    %14 = sbr.rel (%p12) target = $region8
  $region5: #{tpu_custom_call.1} parent=0 // loop_body
    %s16 = ssub.s32 %s11, 1
    %s17 = ssub.s32 %s11, 2
    %s27 = sadd.s32 1, %s20
    %p28 = scmp.ge.s32.totalorder %s27, 1
    %s29 = scalar_select %p28, 0, %s27
    %s30 = sadd.s32 1, %s19
    %s31 = scalar_select %p28, %s30, %s19
    %p32 = scmp.ge.s32.totalorder %s31, 1
    %s33 = scalar_select %p32, 0, %s31
    %s34 = sadd.s32 1, %s18
    %s35 = scalar_select %p32, %s34, %s18
    %p36 = scmp.ge.s32.totalorder %s35, 2
    %s37 = scalar_select %p36, 0, %s35
    %s38 = ssub.s32 %s18, %s37
    %s39 = ssub.s32 %s20, %s29
    %s40 = sor.u32 %s38, %s39
    %s41 = ssub.s32 %s19, %s33
    %s42 = sor.u32 %s40, %s41
    %p43 = scmp.eq.s32.totalorder %s42, 0
    %s45 = sadd.s32 %s44, 1
    %s46 = scalar_select %p43, %s44, %s45
    %p49 = pneg %p43
    %p50 = scmp.eq.s32.totalorder %s11, 1
    %p51 = por %p49, %p50
    %p52 = scmp.ne.s32.totalorder %s44, %s47
    %p53 = scmp.eq.s32.totalorder %s11, 0
    %p54 = por %p52, %p53
    %p55 = scmp.ne.s32.totalorder %s44, %s47
    %p56 = scmp.eq.s32.totalorder %s16, 1
    %p57 = por %p55, %p56
    %p58 = scmp.ne.s32.totalorder %s47, %s48
    %p59 = scmp.eq.s32.totalorder %s16, 0
    %p60 = por %p58, %p59
    %p61 = scmp.ne.s32.totalorder %s47, %s48
    %p62 = scmp.eq.s32.totalorder %s17, 1
    %p63 = por %p61, %p62
    %p65 = scmp.ne.s32.totalorder %s48, %s64
    %p66 = scmp.eq.s32.totalorder %s17, 0
    %p67 = por %p65, %p66
    %s69 = sadd.s32 %s68, 1
    %p72 = scmp.eq.s32.totalorder %s11, 1
    %p73 = scmp.ne.s32.totalorder %s68, %s70
    %p74 = scmp.eq.s32.totalorder %s11, 0
    %p75 = por %p73, %p74
    %p76 = scmp.ne.s32.totalorder %s68, %s70
    %p77 = scmp.eq.s32.totalorder %s16, 1
    %p78 = por %p76, %p77
    %p79 = scmp.ne.s32.totalorder %s70, %s71
    %p80 = scmp.eq.s32.totalorder %s16, 0
    %p81 = por %p79, %p80
    %p82 = scmp.ne.s32.totalorder %s70, %s71
    %p83 = scmp.eq.s32.totalorder %s17, 1
    %p84 = por %p82, %p83
    %p86 = scmp.ne.s32.totalorder %s71, %s85
    %p87 = scmp.eq.s32.totalorder %s17, 0
    %p88 = por %p86, %p87
    %s90 = sadd.s32 %s89, 1
    %p93 = scmp.eq.s32.totalorder %s11, 1
    %p94 = scmp.ne.s32.totalorder %s89, %s91
    %p95 = scmp.eq.s32.totalorder %s11, 0
    %p96 = por %p94, %p95
    %p97 = scmp.ne.s32.totalorder %s89, %s91
    %p98 = scmp.eq.s32.totalorder %s16, 1
    %p99 = por %p97, %p98
    %p100 = scmp.ne.s32.totalorder %s91, %s92
    %p101 = scmp.eq.s32.totalorder %s16, 0
    %p102 = por %p100, %p101
    %p103 = scmp.ne.s32.totalorder %s91, %s92
    %p104 = scmp.eq.s32.totalorder %s17, 1
    %p105 = por %p103, %p104
    %p107 = scmp.ne.s32.totalorder %s92, %s106
    %p108 = scmp.eq.s32.totalorder %s17, 0
    %p109 = por %p107, %p108
    %s111 = sadd.s32 %s110, 1
    %p114 = scmp.eq.s32.totalorder %s11, 1
    %p115 = scmp.ne.s32.totalorder %s110, %s112
    %p116 = scmp.eq.s32.totalorder %s11, 0
    %p117 = por %p115, %p116
    %p118 = scmp.ne.s32.totalorder %s110, %s112
    %p119 = scmp.eq.s32.totalorder %s16, 1
    %p120 = por %p118, %p119
    %p121 = scmp.ne.s32.totalorder %s112, %s113
    %p122 = scmp.eq.s32.totalorder %s16, 0
    %p123 = por %p121, %p122
    %p124 = scmp.ne.s32.totalorder %s112, %s113
    %p125 = scmp.eq.s32.totalorder %s17, 1
    %p126 = por %p124, %p125
    %p128 = scmp.ne.s32.totalorder %s113, %s127
    %p129 = scmp.eq.s32.totalorder %s17, 0
    %p130 = por %p128, %p129
    %s132 = sadd.s32 %s131, 1
    %p135 = scmp.eq.s32.totalorder %s11, 1
    %p136 = scmp.ne.s32.totalorder %s131, %s133
    %p137 = scmp.eq.s32.totalorder %s11, 0
    %p138 = por %p136, %p137
    %p139 = scmp.ne.s32.totalorder %s131, %s133
    %p140 = scmp.eq.s32.totalorder %s16, 1
    %p141 = por %p139, %p140
    %p142 = scmp.ne.s32.totalorder %s133, %s134
    %p143 = scmp.eq.s32.totalorder %s16, 0
    %p144 = por %p142, %p143
    %p145 = scmp.ne.s32.totalorder %s133, %s134
    %p146 = scmp.eq.s32.totalorder %s17, 1
    %p147 = por %p145, %p146
    %p149 = scmp.ne.s32.totalorder %s134, %s148
    %p150 = scmp.eq.s32.totalorder %s17, 0
    %p151 = por %p149, %p150
    %s152 = ssub.s32 %s18, %s37
    %s153 = ssub.s32 %s19, %s33
    %s154 = sor.u32 %s152, %s153
    %p155 = scmp.eq.s32.totalorder %s154, 0
    %s157 = sadd.s32 %s156, 1
    %s158 = scalar_select %p155, %s156, %s157
    %p161 = pneg %p155
    %p162 = scmp.eq.s32.totalorder %s11, 1
    %p163 = por %p161, %p162
    %p164 = scmp.ne.s32.totalorder %s156, %s159
    %p165 = scmp.eq.s32.totalorder %s11, 0
    %p166 = por %p164, %p165
    %p167 = scmp.ne.s32.totalorder %s156, %s159
    %p168 = scmp.eq.s32.totalorder %s16, 1
    %p169 = por %p167, %p168
    %p170 = scmp.ne.s32.totalorder %s159, %s160
    %p171 = scmp.eq.s32.totalorder %s16, 0
    %p172 = por %p170, %p171
    %p173 = scmp.ne.s32.totalorder %s159, %s160
    %p174 = scmp.eq.s32.totalorder %s17, 1
    %p175 = por %p173, %p174
    %p177 = scmp.ne.s32.totalorder %s160, %s176
    %p178 = scmp.eq.s32.totalorder %s17, 0
    %p179 = por %p177, %p178
    %p180 = scmp.le.s32.totalorder 1, %s11
    %p181 = scmp.lt.s32.totalorder %s11, 3
    %p182 = pnand %p180, %p181
    %p183 = pneg %p182
    // Predicated region
    $region9: #{tpu_custom_call.1} parent=5 // pred_check
      _
    $region10: #{tpu_custom_call.1} parent=5 // pred_check_branch
      %185 = sbr.rel (%p182) target = $region12
    $region11: #{tpu_custom_call.1} parent=5 // pred_region
      %s186 = ssub.s32 %s11, 1
      // Predicated region
      $region13: #{tpu_custom_call.1} parent=11 // pred_check
        %p187 = pneg %p81
      $region14: #{tpu_custom_call.1} parent=11 // pred_check_branch
        %189 = sbr.rel (%p187) target = $region16
      $region15: #{tpu_custom_call.1} parent=11 // pred_region
        _
      $region16: #{tpu_custom_call.1} parent=11 // pred_fallthru
        _
      // Predicated region
      $region17: #{tpu_custom_call.1} parent=11 // pred_check
        %p190 = pneg %p102
      $region18: #{tpu_custom_call.1} parent=11 // pred_check_branch
        %192 = sbr.rel (%p190) target = $region20
      $region19: #{tpu_custom_call.1} parent=11 // pred_region
        _
      $region20: #{tpu_custom_call.1} parent=11 // pred_fallthru
        _
      // Predicated region
      $region21: #{tpu_custom_call.1} parent=11 // pred_check
        %p193 = pneg %p123
      $region22: #{tpu_custom_call.1} parent=11 // pred_check_branch
        %195 = sbr.rel (%p193) target = $region24
      $region23: #{tpu_custom_call.1} parent=11 // pred_region
        _
      $region24: #{tpu_custom_call.1} parent=11 // pred_fallthru
        _
      // Predicated region
      $region25: #{tpu_custom_call.1} parent=11 // pred_check
        %p196 = pneg %p144
      $region26: #{tpu_custom_call.1} parent=11 // pred_check_branch
        %198 = sbr.rel (%p196) target = $region28
      $region27: #{tpu_custom_call.1} parent=11 // pred_region
        _
      $region28: #{tpu_custom_call.1} parent=11 // pred_fallthru
        _
    $region12: #{tpu_custom_call.1} parent=5 // pred_fallthru
      _
    %p199 = scmp.lt.s32.totalorder %s11, 2
    // Predicated region
    $region29: #{tpu_custom_call.1} parent=5 // pred_check
      %p200 = pneg %p199
    $region30: #{tpu_custom_call.1} parent=5 // pred_check_branch
      %202 = sbr.rel (%p200) target = $region32
    $region31: #{tpu_custom_call.1} parent=5 // pred_region
      // Predicated region
      $region33: #{tpu_custom_call.1} parent=31 // pred_check
        %p203 = pneg %p54
      $region34: #{tpu_custom_call.1} parent=31 // pred_check_branch
        %205 = sbr.rel (%p203) target = $region36
      $region35: #{tpu_custom_call.1} parent=31 // pred_region
        %s206 = smul.u32 16, %s20
        %s207 = smul.u32 2, %s19
        %p208 = scmp.lt.s32.totalorder %s18, 1
        %s209 = scalar_select %p208, %s18, 1
        %p210 = scmp.lt.s32.totalorder %s206, 15
        %s211 = scalar_select %p210, %s206, 15
        %p212 = scmp.lt.s32.totalorder %s207, 1
        %s213 = scalar_select %p212, %s207, 1
        %s214 = smul.addr %s211, 2
        %s215 = sadd.s32 %s213, %s214
        %s216 = smul.addr %s209, 32
        %s217 = sadd.s32 %s215, %s216
        %s218 = smul.addr %s217, 4
        %s219 = scalar_lea.vmem %s0, %s218
        %s220 = smul.u32 16, %s20
        %s221 = smul.u32 2, %s19
      $region36: #{tpu_custom_call.1} parent=31 // pred_fallthru
        _
    $region32: #{tpu_custom_call.1} parent=5 // pred_fallthru
      _
    %p222 = scmp.le.s32.totalorder 1, %s11
    %p223 = scmp.lt.s32.totalorder %s11, 3
    %p224 = pnand %p222, %p223
    %p225 = pneg %p224
    // Predicated region
    $region37: #{tpu_custom_call.1} parent=5 // pred_check
      _
    $region38: #{tpu_custom_call.1} parent=5 // pred_check_branch
      %227 = sbr.rel (%p224) target = $region40
    $region39: #{tpu_custom_call.1} parent=5 // pred_region
      %s228 = ssub.s32 %s11, 1
      %s229 = smul.u32 16, %s23
      %s230 = smul.u32 2, %s22
      %p231 = scmp.lt.s32.totalorder %s21, 1
      %s232 = scalar_select %p231, %s21, 1
      %p233 = scmp.lt.s32.totalorder %s229, 15
      %s234 = scalar_select %p233, %s229, 15
      %p235 = scmp.lt.s32.totalorder %s230, 1
      %s236 = scalar_select %p235, %s230, 1
      %s237 = smul.addr %s234, 2
      %s238 = sadd.s32 %s236, %s237
      %s239 = smul.addr %s232, 32
      %s240 = sadd.s32 %s238, %s239
      %s241 = smul.addr %s240, 4
      %s242 = scalar_lea.vmem %s0, %s241
      %p243 = pneg %p60
      %p244 = pneg %p57
      %p245 = pneg %p81
      %p246 = pneg %p78
      %p247 = pneg %p102
      %p248 = pneg %p99
      %p249 = pneg %p123
      %p250 = pneg %p120
      %p251 = pneg %p144
      %p252 = pneg %p141
      %p253 = pneg %p172
      %p254 = pneg %p169
      %p255 = scmp.lt.s32.totalorder %s21, 1
      %s256 = scalar_select %p255, %s21, 1
      %p257 = scmp.lt.s32.totalorder %s22, 0
      %s258 = scalar_select %p257, %s22, 0
      %s259 = smul.addr %s256, 32
      %s260 = sadd.s32 %s258, %s259
      %s261 = smul.addr %s260, 8
      %s262 = scalar_lea.vmem %s5, %s261
      %s263 = smul.u32 16, %s23
      %s264 = smul.u32 2, %s22
      %p265 = scmp.lt.s32.totalorder %s21, 1
      %s266 = scalar_select %p265, %s21, 1
      %p267 = scmp.lt.s32.totalorder %s263, 15
      %s268 = scalar_select %p267, %s263, 15
      %p269 = scmp.lt.s32.totalorder %s264, 1
      %s270 = scalar_select %p269, %s264, 1
      %s271 = smul.addr %s268, 2
      %s272 = sadd.s32 %s270, %s271
      %s273 = smul.addr %s266, 32
      %s274 = sadd.s32 %s272, %s273
      %s275 = smul.addr %s274, 4
      %s276 = scalar_lea.vmem %s0, %s275
      %s277 = smul.u32 16, %s23
      %s278 = smul.u32 2, %s22
      %p279 = scmp.lt.s32.totalorder %s21, 1
      %s280 = scalar_select %p279, %s21, 1
      %p281 = scmp.lt.s32.totalorder %s22, 0
      %s282 = scalar_select %p281, %s22, 0
      %s283 = smul.addr %s280, 32
      %s284 = sadd.s32 %s282, %s283
      %s285 = smul.addr %s284, 8
      %s286 = scalar_lea.vmem %s5, %s285
      %v288 = vld [vmem:[%s276] sm:$0xf]
      %v289 = vld [vmem:[%s276 + $0x4] sm:$0xf]
      %v290 = vld [vmem:[%s276 + $0x8] sm:$0xf]
      %v291 = vld [vmem:[%s276 + $0xc] sm:$0xf]
      %v292 = vld [vmem:[%s276 + $0x10] sm:$0xf]
      %v293 = vld [vmem:[%s276 + $0x14] sm:$0xf]
      %v294 = vld [vmem:[%s276 + $0x18] sm:$0xf]
      %v295 = vld [vmem:[%s276 + $0x1c] sm:$0xf]
      %v296 = vld [vmem:[%s276 + $0x20] sm:$0xf]
      %v297 = vld [vmem:[%s276 + $0x24] sm:$0xf]
      %v298 = vld [vmem:[%s276 + $0x28] sm:$0xf]
      %v299 = vld [vmem:[%s276 + $0x2c] sm:$0xf]
      %v300 = vld [vmem:[%s276 + $0x30] sm:$0xf]
      %v301 = vld [vmem:[%s276 + $0x34] sm:$0xf]
      %v302 = vld [vmem:[%s276 + $0x38] sm:$0xf]
      %v303 = vld [vmem:[%s276 + $0x3c] sm:$0xf]
      %v304 = vld [vmem:[%s276 + $0x40] sm:$0xf]
      %v305 = vld [vmem:[%s276 + $0x44] sm:$0xf]
      %v306 = vld [vmem:[%s276 + $0x48] sm:$0xf]
      %v307 = vld [vmem:[%s276 + $0x4c] sm:$0xf]
      %v308 = vld [vmem:[%s276 + $0x50] sm:$0xf]
      %v309 = vld [vmem:[%s276 + $0x54] sm:$0xf]
      %v310 = vld [vmem:[%s276 + $0x58] sm:$0xf]
      %v311 = vld [vmem:[%s276 + $0x5c] sm:$0xf]
      %v312 = vld [vmem:[%s276 + $0x60] sm:$0xf]
      %v313 = vld [vmem:[%s276 + $0x64] sm:$0xf]
      %v314 = vld [vmem:[%s276 + $0x68] sm:$0xf]
      %v315 = vld [vmem:[%s276 + $0x6c] sm:$0xf]
      %v316 = vld [vmem:[%s276 + $0x70] sm:$0xf]
      %v317 = vld [vmem:[%s276 + $0x74] sm:$0xf]
      %v318 = vld [vmem:[%s276 + $0x78] sm:$0xf]
      %v319 = vld [vmem:[%s276 + $0x7c] sm:$0xf]
      %v320 = vld [vmem:[%s1] sm:$0xff]
      %v321 = vld [vmem:[%s2] sm:$0x3]
      %v323 = vperm.slane %v321, 0
      %v324 = vperm.slane %v321, 1
      %v359 = vunpack.c.l.b16 %v288
      %v360 = vunpack.c.l.b16 %v289
      %v361 = vunpack.c.l.b16 %v290
      %v362 = vunpack.c.l.b16 %v291
      %v363 = vunpack.c.l.b16 %v292
      %v364 = vunpack.c.l.b16 %v293
      %v365 = vunpack.c.l.b16 %v294
      %v366 = vunpack.c.l.b16 %v295
      %v367 = vunpack.c.l.b16 %v296
      %v368 = vunpack.c.l.b16 %v297
      %v369 = vunpack.c.l.b16 %v298
      %v370 = vunpack.c.l.b16 %v299
      %v371 = vunpack.c.l.b16 %v300
      %v372 = vunpack.c.l.b16 %v301
      %v373 = vunpack.c.l.b16 %v302
      %v374 = vunpack.c.l.b16 %v303
      %v375 = vunpack.c.l.b16 %v304
      %v376 = vunpack.c.l.b16 %v305
      %v377 = vunpack.c.l.b16 %v306
      %v378 = vunpack.c.l.b16 %v307
      %v379 = vunpack.c.l.b16 %v308
      %v380 = vunpack.c.l.b16 %v309
      %v381 = vunpack.c.l.b16 %v310
      %v382 = vunpack.c.l.b16 %v311
      %v383 = vunpack.c.l.b16 %v312
      %v384 = vunpack.c.l.b16 %v313
      %v385 = vunpack.c.l.b16 %v314
      %v386 = vunpack.c.l.b16 %v315
      %v387 = vunpack.c.l.b16 %v316
      %v388 = vunpack.c.l.b16 %v317
      %v389 = vunpack.c.l.b16 %v318
      %v390 = vunpack.c.l.b16 %v319
      %v391 = vpack.c.b16 %v360, %v359
      %v392 = vpack.c.b16 %v362, %v361
      %v393 = vpack.c.b16 %v364, %v363
      %v394 = vpack.c.b16 %v366, %v365
      %v395 = vpack.c.b16 %v368, %v367
      %v396 = vpack.c.b16 %v370, %v369
      %v397 = vpack.c.b16 %v372, %v371
      %v398 = vpack.c.b16 %v374, %v373
      %v399 = vpack.c.b16 %v376, %v375
      %v400 = vpack.c.b16 %v378, %v377
      %v401 = vpack.c.b16 %v380, %v379
      %v402 = vpack.c.b16 %v382, %v381
      %v403 = vpack.c.b16 %v384, %v383
      %v404 = vpack.c.b16 %v386, %v385
      %v405 = vpack.c.b16 %v388, %v387
      %v406 = vpack.c.b16 %v390, %v389
      %v408 = vunpack.c.l.b16 %v320
      %v409 = vunpack.c.h.b16 %v320
      %v410 = vpack.c.b16 %v408, %v408
      %v411 = vpack.c.b16 %v409, %v409
      %vm412 = vcmask 64512
      %v414 = vsel %vm412, %v391, 0
      %v417 = vsel %vm412, %v392, 0
      %v420 = vsel %vm412, %v393, 0
      %v423 = vsel %vm412, %v394, 0
      %v426 = vsel %vm412, %v395, 0
      %v429 = vsel %vm412, %v396, 0
      %v432 = vsel %vm412, %v397, 0
      %v435 = vsel %vm412, %v398, 0
      %v438 = vsel %vm412, %v399, 0
      %v441 = vsel %vm412, %v400, 0
      %v444 = vsel %vm412, %v401, 0
      %v447 = vsel %vm412, %v402, 0
      %v450 = vsel %vm412, %v403, 0
      %v453 = vsel %vm412, %v404, 0
      %v456 = vsel %vm412, %v405, 0
      %v459 = vsel %vm412, %v406, 0
      %vm461 = vcmask 1043456
      %v463 = vsel %vm461, %v410, 0
      %v466 = vsel %vm461, %v411, 0
      %468 = vmatpush.bf16.msra.mxu0 0
      %469 = vmatpush.bf16.msra.mxu0 0
      %470 = vmatpush.bf16.msra.mxu0 0
      %471 = vmatpush.bf16.msra.mxu0 0
      %472 = vmatpush.bf16.msra.mxu0 0
      %473 = vmatpush.bf16.msra.mxu0 0
      %474 = vmatpush.bf16.msra.mxu0 0
      %475 = vmatpush.bf16.msra.mxu0 %v463
      %476 = vmatmul.bf16.gmra.mxu0 %v414
      %v477 = vpop.f32.mrf.mxu0
      %v478 = vadd.f32 %v323, %v477
      %v479 = vpop.f32.mrf.mxu0
      %v480 = vadd.f32 %v323, %v479
      %481 = vmatmul.bf16.gmra.mxu0 %v417
      %v482 = vpop.f32.mrf.mxu0
      %v483 = vadd.f32 %v323, %v482
      %v484 = vpop.f32.mrf.mxu0
      %v485 = vadd.f32 %v323, %v484
      %486 = vmatmul.bf16.gmra.mxu0 %v420
      %v487 = vpop.f32.mrf.mxu0
      %v488 = vadd.f32 %v323, %v487
      %v489 = vpop.f32.mrf.mxu0
      %v490 = vadd.f32 %v323, %v489
      %491 = vmatmul.bf16.gmra.mxu0 %v423
      %v492 = vpop.f32.mrf.mxu0
      %v493 = vadd.f32 %v323, %v492
      %v494 = vpop.f32.mrf.mxu0
      %v495 = vadd.f32 %v323, %v494
      %496 = vmatmul.bf16.gmra.mxu0 %v426
      %v497 = vpop.f32.mrf.mxu0
      %v498 = vadd.f32 %v323, %v497
      %v499 = vpop.f32.mrf.mxu0
      %v500 = vadd.f32 %v323, %v499
      %501 = vmatmul.bf16.gmra.mxu0 %v429
      %v502 = vpop.f32.mrf.mxu0
      %v503 = vadd.f32 %v323, %v502
      %v504 = vpop.f32.mrf.mxu0
      %v505 = vadd.f32 %v323, %v504
      %506 = vmatmul.bf16.gmra.mxu0 %v432
      %v507 = vpop.f32.mrf.mxu0
      %v508 = vadd.f32 %v323, %v507
      %v509 = vpop.f32.mrf.mxu0
      %v510 = vadd.f32 %v323, %v509
      %511 = vmatmul.bf16.gmra.mxu0 %v435
      %v512 = vpop.f32.mrf.mxu0
      %v513 = vadd.f32 %v323, %v512
      %v514 = vpop.f32.mrf.mxu0
      %v515 = vadd.f32 %v323, %v514
      %516 = vmatmul.bf16.gmra.mxu0 %v438
      %v517 = vpop.f32.mrf.mxu0
      %v518 = vadd.f32 %v323, %v517
      %v519 = vpop.f32.mrf.mxu0
      %v520 = vadd.f32 %v323, %v519
      %521 = vmatmul.bf16.gmra.mxu0 %v441
      %v522 = vpop.f32.mrf.mxu0
      %v523 = vadd.f32 %v323, %v522
      %v524 = vpop.f32.mrf.mxu0
      %v525 = vadd.f32 %v323, %v524
      %526 = vmatmul.bf16.gmra.mxu0 %v444
      %v527 = vpop.f32.mrf.mxu0
      %v528 = vadd.f32 %v323, %v527
      %v529 = vpop.f32.mrf.mxu0
      %v530 = vadd.f32 %v323, %v529
      %531 = vmatmul.bf16.gmra.mxu0 %v447
      %v532 = vpop.f32.mrf.mxu0
      %v533 = vadd.f32 %v323, %v532
      %v534 = vpop.f32.mrf.mxu0
      %v535 = vadd.f32 %v323, %v534
      %536 = vmatmul.bf16.gmra.mxu0 %v450
      %v537 = vpop.f32.mrf.mxu0
      %v538 = vadd.f32 %v323, %v537
      %v539 = vpop.f32.mrf.mxu0
      %v540 = vadd.f32 %v323, %v539
      %541 = vmatmul.bf16.gmra.mxu0 %v453
      %v542 = vpop.f32.mrf.mxu0
      %v543 = vadd.f32 %v323, %v542
      %v544 = vpop.f32.mrf.mxu0
      %v545 = vadd.f32 %v323, %v544
      %546 = vmatmul.bf16.gmra.mxu0 %v456
      %v547 = vpop.f32.mrf.mxu0
      %v548 = vadd.f32 %v323, %v547
      %v549 = vpop.f32.mrf.mxu0
      %v550 = vadd.f32 %v323, %v549
      %551 = vmatmul.bf16.gmra.mxu0 %v459
      %v552 = vpop.f32.mrf.mxu0
      %v553 = vadd.f32 %v323, %v552
      %v554 = vpop.f32.mrf.mxu0
      %v555 = vadd.f32 %v323, %v554
      %556 = vdwg.mxu0
      %557 = vmatpush.bf16.msra.mxu0 0
      %558 = vmatpush.bf16.msra.mxu0 0
      %559 = vmatpush.bf16.msra.mxu0 0
      %560 = vmatpush.bf16.msra.mxu0 0
      %561 = vmatpush.bf16.msra.mxu0 0
      %562 = vmatpush.bf16.msra.mxu0 0
      %563 = vmatpush.bf16.msra.mxu0 0
      %564 = vmatpush.bf16.msra.mxu0 %v466
      %565 = vmatmul.bf16.gmra.mxu0 %v414
      %v566 = vpop.f32.mrf.mxu0
      %v567 = vadd.f32 %v324, %v566
      %v568 = vpop.f32.mrf.mxu0
      %v569 = vadd.f32 %v324, %v568
      %570 = vmatmul.bf16.gmra.mxu0 %v417
      %v571 = vpop.f32.mrf.mxu0
      %v572 = vadd.f32 %v324, %v571
      %v573 = vpop.f32.mrf.mxu0
      %v574 = vadd.f32 %v324, %v573
      %575 = vmatmul.bf16.gmra.mxu0 %v420
      %v576 = vpop.f32.mrf.mxu0
      %v577 = vadd.f32 %v324, %v576
      %v578 = vpop.f32.mrf.mxu0
      %v579 = vadd.f32 %v324, %v578
      %580 = vmatmul.bf16.gmra.mxu0 %v423
      %v581 = vpop.f32.mrf.mxu0
      %v582 = vadd.f32 %v324, %v581
      %v583 = vpop.f32.mrf.mxu0
      %v584 = vadd.f32 %v324, %v583
      %585 = vmatmul.bf16.gmra.mxu0 %v426
      %v586 = vpop.f32.mrf.mxu0
      %v587 = vadd.f32 %v324, %v586
      %v588 = vpop.f32.mrf.mxu0
      %v589 = vadd.f32 %v324, %v588
      %590 = vmatmul.bf16.gmra.mxu0 %v429
      %v591 = vpop.f32.mrf.mxu0
      %v592 = vadd.f32 %v324, %v591
      %v593 = vpop.f32.mrf.mxu0
      %v594 = vadd.f32 %v324, %v593
      %595 = vmatmul.bf16.gmra.mxu0 %v432
      %v596 = vpop.f32.mrf.mxu0
      %v597 = vadd.f32 %v324, %v596
      %v598 = vpop.f32.mrf.mxu0
      %v599 = vadd.f32 %v324, %v598
      %600 = vmatmul.bf16.gmra.mxu0 %v435
      %v601 = vpop.f32.mrf.mxu0
      %v602 = vadd.f32 %v324, %v601
      %v603 = vpop.f32.mrf.mxu0
      %v604 = vadd.f32 %v324, %v603
      %605 = vmatmul.bf16.gmra.mxu0 %v438
      %v606 = vpop.f32.mrf.mxu0
      %v607 = vadd.f32 %v324, %v606
      %v608 = vpop.f32.mrf.mxu0
      %v609 = vadd.f32 %v324, %v608
      %610 = vmatmul.bf16.gmra.mxu0 %v441
      %v611 = vpop.f32.mrf.mxu0
      %v612 = vadd.f32 %v324, %v611
      %v613 = vpop.f32.mrf.mxu0
      %v614 = vadd.f32 %v324, %v613
      %615 = vmatmul.bf16.gmra.mxu0 %v444
      %v616 = vpop.f32.mrf.mxu0
      %v617 = vadd.f32 %v324, %v616
      %v618 = vpop.f32.mrf.mxu0
      %v619 = vadd.f32 %v324, %v618
      %620 = vmatmul.bf16.gmra.mxu0 %v447
      %v621 = vpop.f32.mrf.mxu0
      %v622 = vadd.f32 %v324, %v621
      %v623 = vpop.f32.mrf.mxu0
      %v624 = vadd.f32 %v324, %v623
      %625 = vmatmul.bf16.gmra.mxu0 %v450
      %v626 = vpop.f32.mrf.mxu0
      %v627 = vadd.f32 %v324, %v626
      %v628 = vpop.f32.mrf.mxu0
      %v629 = vadd.f32 %v324, %v628
      %630 = vmatmul.bf16.gmra.mxu0 %v453
      %v631 = vpop.f32.mrf.mxu0
      %v632 = vadd.f32 %v324, %v631
      %v633 = vpop.f32.mrf.mxu0
      %v634 = vadd.f32 %v324, %v633
      %635 = vmatmul.bf16.gmra.mxu0 %v456
      %v636 = vpop.f32.mrf.mxu0
      %v637 = vadd.f32 %v324, %v636
      %v638 = vpop.f32.mrf.mxu0
      %v639 = vadd.f32 %v324, %v638
      %640 = vmatmul.bf16.gmra.mxu0 %v459
      %v641 = vpop.f32.mrf.mxu0
      %v642 = vadd.f32 %v324, %v641
      %v643 = vpop.f32.mrf.mxu0
      %v644 = vadd.f32 %v324, %v643
      %645 = vdwg.mxu0
      %v646 = vmax.f32 %v478, 0.0
      %v647 = vmax.f32 %v567, 0.0
      %v648 = vmax.f32 %v480, 0.0
      %v649 = vmax.f32 %v569, 0.0
      %v650 = vmax.f32 %v483, 0.0
      %v651 = vmax.f32 %v572, 0.0
      %v652 = vmax.f32 %v485, 0.0
      %v653 = vmax.f32 %v574, 0.0
      %v654 = vmax.f32 %v488, 0.0
      %v655 = vmax.f32 %v577, 0.0
      %v656 = vmax.f32 %v490, 0.0
      %v657 = vmax.f32 %v579, 0.0
      %v658 = vmax.f32 %v493, 0.0
      %v659 = vmax.f32 %v582, 0.0
      %v660 = vmax.f32 %v495, 0.0
      %v661 = vmax.f32 %v584, 0.0
      %v662 = vmax.f32 %v498, 0.0
      %v663 = vmax.f32 %v587, 0.0
      %v664 = vmax.f32 %v500, 0.0
      %v665 = vmax.f32 %v589, 0.0
      %v666 = vmax.f32 %v503, 0.0
      %v667 = vmax.f32 %v592, 0.0
      %v668 = vmax.f32 %v505, 0.0
      %v669 = vmax.f32 %v594, 0.0
      %v670 = vmax.f32 %v508, 0.0
      %v671 = vmax.f32 %v597, 0.0
      %v672 = vmax.f32 %v510, 0.0
      %v673 = vmax.f32 %v599, 0.0
      %v674 = vmax.f32 %v513, 0.0
      %v675 = vmax.f32 %v602, 0.0
      %v676 = vmax.f32 %v515, 0.0
      %v677 = vmax.f32 %v604, 0.0
      %v678 = vmax.f32 %v518, 0.0
      %v679 = vmax.f32 %v607, 0.0
      %v680 = vmax.f32 %v520, 0.0
      %v681 = vmax.f32 %v609, 0.0
      %v682 = vmax.f32 %v523, 0.0
      %v683 = vmax.f32 %v612, 0.0
      %v684 = vmax.f32 %v525, 0.0
      %v685 = vmax.f32 %v614, 0.0
      %v686 = vmax.f32 %v528, 0.0
      %v687 = vmax.f32 %v617, 0.0
      %v688 = vmax.f32 %v530, 0.0
      %v689 = vmax.f32 %v619, 0.0
      %v690 = vmax.f32 %v533, 0.0
      %v691 = vmax.f32 %v622, 0.0
      %v692 = vmax.f32 %v535, 0.0
      %v693 = vmax.f32 %v624, 0.0
      %v694 = vmax.f32 %v538, 0.0
      %v695 = vmax.f32 %v627, 0.0
      %v696 = vmax.f32 %v540, 0.0
      %v697 = vmax.f32 %v629, 0.0
      %v698 = vmax.f32 %v543, 0.0
      %v699 = vmax.f32 %v632, 0.0
      %v700 = vmax.f32 %v545, 0.0
      %v701 = vmax.f32 %v634, 0.0
      %v702 = vmax.f32 %v548, 0.0
      %v703 = vmax.f32 %v637, 0.0
      %v704 = vmax.f32 %v550, 0.0
      %v705 = vmax.f32 %v639, 0.0
      %v706 = vmax.f32 %v553, 0.0
      %v707 = vmax.f32 %v642, 0.0
      %v708 = vmax.f32 %v555, 0.0
      %v709 = vmax.f32 %v644, 0.0
      %v710 = vpack.c.bf16 %v648, %v646
      %v711 = vpack.c.bf16 %v649, %v647
      %v712 = vpack.c.bf16 %v652, %v650
      %v713 = vpack.c.bf16 %v653, %v651
      %v714 = vpack.c.bf16 %v656, %v654
      %v715 = vpack.c.bf16 %v657, %v655
      %v716 = vpack.c.bf16 %v660, %v658
      %v717 = vpack.c.bf16 %v661, %v659
      %v718 = vpack.c.bf16 %v664, %v662
      %v719 = vpack.c.bf16 %v665, %v663
      %v720 = vpack.c.bf16 %v668, %v666
      %v721 = vpack.c.bf16 %v669, %v667
      %v722 = vpack.c.bf16 %v672, %v670
      %v723 = vpack.c.bf16 %v673, %v671
      %v724 = vpack.c.bf16 %v676, %v674
      %v725 = vpack.c.bf16 %v677, %v675
      %v726 = vpack.c.bf16 %v680, %v678
      %v727 = vpack.c.bf16 %v681, %v679
      %v728 = vpack.c.bf16 %v684, %v682
      %v729 = vpack.c.bf16 %v685, %v683
      %v730 = vpack.c.bf16 %v688, %v686
      %v731 = vpack.c.bf16 %v689, %v687
      %v732 = vpack.c.bf16 %v692, %v690
      %v733 = vpack.c.bf16 %v693, %v691
      %v734 = vpack.c.bf16 %v696, %v694
      %v735 = vpack.c.bf16 %v697, %v695
      %v736 = vpack.c.bf16 %v700, %v698
      %v737 = vpack.c.bf16 %v701, %v699
      %v738 = vpack.c.bf16 %v704, %v702
      %v739 = vpack.c.bf16 %v705, %v703
      %v740 = vpack.c.bf16 %v708, %v706
      %v741 = vpack.c.bf16 %v709, %v707
      %v742 = vld [vmem:[%s3] sm:$0xff]
      %v743 = vld [vmem:[%s3 + $0x8] sm:$0xff]
      %v744 = vld [vmem:[%s3 + $0x10] sm:$0xff]
      %v745 = vld [vmem:[%s3 + $0x18] sm:$0xff]
      %v746 = vld [vmem:[%s3 + $0x20] sm:$0xff]
      %v747 = vld [vmem:[%s3 + $0x28] sm:$0xff]
      %v748 = vld [vmem:[%s3 + $0x30] sm:$0xff]
      %v749 = vld [vmem:[%s3 + $0x38] sm:$0xff]
      %v750 = vld [vmem:[%s3 + $0x40] sm:$0xff]
      %v751 = vld [vmem:[%s3 + $0x48] sm:$0xff]
      %v752 = vld [vmem:[%s3 + $0x50] sm:$0xff]
      %v753 = vld [vmem:[%s3 + $0x58] sm:$0xff]
      %v754 = vld [vmem:[%s3 + $0x60] sm:$0xff]
      %v755 = vld [vmem:[%s3 + $0x68] sm:$0xff]
      %v756 = vld [vmem:[%s3 + $0x70] sm:$0xff]
      %v757 = vld [vmem:[%s3 + $0x78] sm:$0xff]
      %v758 = vld [vmem:[%s3 + $0x80] sm:$0xff]
      %v759 = vld [vmem:[%s3 + $0x88] sm:$0xff]
      %v760 = vld [vmem:[%s3 + $0x90] sm:$0xff]
      %v761 = vld [vmem:[%s3 + $0x98] sm:$0xff]
      %v762 = vld [vmem:[%s3 + $0xa0] sm:$0xff]
      %v763 = vld [vmem:[%s3 + $0xa8] sm:$0xff]
      %v764 = vld [vmem:[%s3 + $0xb0] sm:$0xff]
      %v765 = vld [vmem:[%s3 + $0xb8] sm:$0xff]
      %v766 = vld [vmem:[%s3 + $0xc0] sm:$0xff]
      %v767 = vld [vmem:[%s3 + $0xc8] sm:$0xff]
      %v768 = vld [vmem:[%s3 + $0xd0] sm:$0xff]
      %v769 = vld [vmem:[%s3 + $0xd8] sm:$0xff]
      %v770 = vld [vmem:[%s3 + $0xe0] sm:$0xff]
      %v771 = vld [vmem:[%s3 + $0xe8] sm:$0xff]
      %v772 = vld [vmem:[%s3 + $0xf0] sm:$0xff]
      %v773 = vld [vmem:[%s3 + $0xf8] sm:$0xff]
      %v774 = vld [vmem:[%s4] sm:$0x3]
      %v776 = vperm.slane %v774, 0
      %v777 = vperm.slane %v774, 1
      %v812 = vunpack.c.l.b16 %v742
      %v813 = vunpack.c.h.b16 %v742
      %v814 = vunpack.c.l.b16 %v743
      %v815 = vunpack.c.h.b16 %v743
      %v816 = vunpack.c.l.b16 %v744
      %v817 = vunpack.c.h.b16 %v744
      %v818 = vunpack.c.l.b16 %v745
      %v819 = vunpack.c.h.b16 %v745
      %v820 = vunpack.c.l.b16 %v746
      %v821 = vunpack.c.h.b16 %v746
      %v822 = vunpack.c.l.b16 %v747
      %v823 = vunpack.c.h.b16 %v747
      %v824 = vunpack.c.l.b16 %v748
      %v825 = vunpack.c.h.b16 %v748
      %v826 = vunpack.c.l.b16 %v749
      %v827 = vunpack.c.h.b16 %v749
      %v828 = vunpack.c.l.b16 %v750
      %v829 = vunpack.c.h.b16 %v750
      %v830 = vunpack.c.l.b16 %v751
      %v831 = vunpack.c.h.b16 %v751
      %v832 = vunpack.c.l.b16 %v752
      %v833 = vunpack.c.h.b16 %v752
      %v834 = vunpack.c.l.b16 %v753
      %v835 = vunpack.c.h.b16 %v753
      %v836 = vunpack.c.l.b16 %v754
      %v837 = vunpack.c.h.b16 %v754
      %v838 = vunpack.c.l.b16 %v755
      %v839 = vunpack.c.h.b16 %v755
      %v840 = vunpack.c.l.b16 %v756
      %v841 = vunpack.c.h.b16 %v756
      %v842 = vunpack.c.l.b16 %v757
      %v843 = vunpack.c.h.b16 %v757
      %v844 = vunpack.c.l.b16 %v758
      %v845 = vunpack.c.h.b16 %v758
      %v846 = vunpack.c.l.b16 %v759
      %v847 = vunpack.c.h.b16 %v759
      %v848 = vunpack.c.l.b16 %v760
      %v849 = vunpack.c.h.b16 %v760
      %v850 = vunpack.c.l.b16 %v761
      %v851 = vunpack.c.h.b16 %v761
      %v852 = vunpack.c.l.b16 %v762
      %v853 = vunpack.c.h.b16 %v762
      %v854 = vunpack.c.l.b16 %v763
      %v855 = vunpack.c.h.b16 %v763
      %v856 = vunpack.c.l.b16 %v764
      %v857 = vunpack.c.h.b16 %v764
      %v858 = vunpack.c.l.b16 %v765
      %v859 = vunpack.c.h.b16 %v765
      %v860 = vunpack.c.l.b16 %v766
      %v861 = vunpack.c.h.b16 %v766
      %v862 = vunpack.c.l.b16 %v767
      %v863 = vunpack.c.h.b16 %v767
      %v864 = vunpack.c.l.b16 %v768
      %v865 = vunpack.c.h.b16 %v768
      %v866 = vunpack.c.l.b16 %v769
      %v867 = vunpack.c.h.b16 %v769
      %v868 = vunpack.c.l.b16 %v770
      %v869 = vunpack.c.h.b16 %v770
      %v870 = vunpack.c.l.b16 %v771
      %v871 = vunpack.c.h.b16 %v771
      %v872 = vunpack.c.l.b16 %v772
      %v873 = vunpack.c.h.b16 %v772
      %v874 = vunpack.c.l.b16 %v773
      %v875 = vunpack.c.h.b16 %v773
      %v876 = vpack.c.b16 %v814, %v812
      %v877 = vpack.c.b16 %v815, %v813
      %v878 = vpack.c.b16 %v818, %v816
      %v879 = vpack.c.b16 %v819, %v817
      %v880 = vpack.c.b16 %v822, %v820
      %v881 = vpack.c.b16 %v823, %v821
      %v882 = vpack.c.b16 %v826, %v824
      %v883 = vpack.c.b16 %v827, %v825
      %v884 = vpack.c.b16 %v830, %v828
      %v885 = vpack.c.b16 %v831, %v829
      %v886 = vpack.c.b16 %v834, %v832
      %v887 = vpack.c.b16 %v835, %v833
      %v888 = vpack.c.b16 %v838, %v836
      %v889 = vpack.c.b16 %v839, %v837
      %v890 = vpack.c.b16 %v842, %v840
      %v891 = vpack.c.b16 %v843, %v841
      %v892 = vpack.c.b16 %v846, %v844
      %v893 = vpack.c.b16 %v847, %v845
      %v894 = vpack.c.b16 %v850, %v848
      %v895 = vpack.c.b16 %v851, %v849
      %v896 = vpack.c.b16 %v854, %v852
      %v897 = vpack.c.b16 %v855, %v853
      %v898 = vpack.c.b16 %v858, %v856
      %v899 = vpack.c.b16 %v859, %v857
      %v900 = vpack.c.b16 %v862, %v860
      %v901 = vpack.c.b16 %v863, %v861
      %v902 = vpack.c.b16 %v866, %v864
      %v903 = vpack.c.b16 %v867, %v865
      %v904 = vpack.c.b16 %v870, %v868
      %v905 = vpack.c.b16 %v871, %v869
      %v906 = vpack.c.b16 %v874, %v872
      %v907 = vpack.c.b16 %v875, %v873
      %940 = vmatpush.bf16.msra.mxu0 %v890
      %941 = vmatpush.bf16.msra.mxu0 %v888
      %942 = vmatpush.bf16.msra.mxu0 %v886
      %943 = vmatpush.bf16.msra.mxu0 %v884
      %944 = vmatpush.bf16.msra.mxu0 %v882
      %945 = vmatpush.bf16.msra.mxu0 %v880
      %946 = vmatpush.bf16.msra.mxu0 %v878
      %947 = vmatpush.bf16.msra.mxu0 %v876
      %948 = vmatmul.bf16.gmra.mxu0 %v710
      %v949 = vpop.f32.mrf.mxu0
      %v950 = vadd.f32 %v776, %v949
      %v951 = vpop.f32.mrf.mxu0
      %v952 = vadd.f32 %v776, %v951
      %953 = vmatmul.bf16.gmra.mxu0 %v712
      %v954 = vpop.f32.mrf.mxu0
      %v955 = vadd.f32 %v776, %v954
      %v956 = vpop.f32.mrf.mxu0
      %v957 = vadd.f32 %v776, %v956
      %958 = vmatmul.bf16.gmra.mxu0 %v714
      %v959 = vpop.f32.mrf.mxu0
      %v960 = vadd.f32 %v776, %v959
      %v961 = vpop.f32.mrf.mxu0
      %v962 = vadd.f32 %v776, %v961
      %963 = vmatmul.bf16.gmra.mxu0 %v716
      %v964 = vpop.f32.mrf.mxu0
      %v965 = vadd.f32 %v776, %v964
      %v966 = vpop.f32.mrf.mxu0
      %v967 = vadd.f32 %v776, %v966
      %968 = vmatmul.bf16.gmra.mxu0 %v718
      %v969 = vpop.f32.mrf.mxu0
      %v970 = vadd.f32 %v776, %v969
      %v971 = vpop.f32.mrf.mxu0
      %v972 = vadd.f32 %v776, %v971
      %973 = vmatmul.bf16.gmra.mxu0 %v720
      %v974 = vpop.f32.mrf.mxu0
      %v975 = vadd.f32 %v776, %v974
      %v976 = vpop.f32.mrf.mxu0
      %v977 = vadd.f32 %v776, %v976
      %978 = vmatmul.bf16.gmra.mxu0 %v722
      %v979 = vpop.f32.mrf.mxu0
      %v980 = vadd.f32 %v776, %v979
      %v981 = vpop.f32.mrf.mxu0
      %v982 = vadd.f32 %v776, %v981
      %983 = vmatmul.bf16.gmra.mxu0 %v724
      %v984 = vpop.f32.mrf.mxu0
      %v985 = vadd.f32 %v776, %v984
      %v986 = vpop.f32.mrf.mxu0
      %v987 = vadd.f32 %v776, %v986
      %988 = vmatmul.bf16.gmra.mxu0 %v726
      %v989 = vpop.f32.mrf.mxu0
      %v990 = vadd.f32 %v776, %v989
      %v991 = vpop.f32.mrf.mxu0
      %v992 = vadd.f32 %v776, %v991
      %993 = vmatmul.bf16.gmra.mxu0 %v728
      %v994 = vpop.f32.mrf.mxu0
      %v995 = vadd.f32 %v776, %v994
      %v996 = vpop.f32.mrf.mxu0
      %v997 = vadd.f32 %v776, %v996
      %998 = vmatmul.bf16.gmra.mxu0 %v730
      %v999 = vpop.f32.mrf.mxu0
      %v1000 = vadd.f32 %v776, %v999
      %v1001 = vpop.f32.mrf.mxu0
      %v1002 = vadd.f32 %v776, %v1001
      %1003 = vmatmul.bf16.gmra.mxu0 %v732
      %v1004 = vpop.f32.mrf.mxu0
      %v1005 = vadd.f32 %v776, %v1004
      %v1006 = vpop.f32.mrf.mxu0
      %v1007 = vadd.f32 %v776, %v1006
      %1008 = vmatmul.bf16.gmra.mxu0 %v734
      %v1009 = vpop.f32.mrf.mxu0
      %v1010 = vadd.f32 %v776, %v1009
      %v1011 = vpop.f32.mrf.mxu0
      %v1012 = vadd.f32 %v776, %v1011
      %1013 = vmatmul.bf16.gmra.mxu0 %v736
      %v1014 = vpop.f32.mrf.mxu0
      %v1015 = vadd.f32 %v776, %v1014
      %v1016 = vpop.f32.mrf.mxu0
      %v1017 = vadd.f32 %v776, %v1016
      %1018 = vmatmul.bf16.gmra.mxu0 %v738
      %v1019 = vpop.f32.mrf.mxu0
      %v1020 = vadd.f32 %v776, %v1019
      %v1021 = vpop.f32.mrf.mxu0
      %v1022 = vadd.f32 %v776, %v1021
      %1023 = vmatmul.bf16.gmra.mxu0 %v740
      %v1024 = vpop.f32.mrf.mxu0
      %v1025 = vadd.f32 %v776, %v1024
      %v1026 = vpop.f32.mrf.mxu0
      %v1027 = vadd.f32 %v776, %v1026
      %1028 = vdwg.mxu0
      %1029 = vmatpush.bf16.msra.mxu0 %v906
      %1030 = vmatpush.bf16.msra.mxu0 %v904
      %1031 = vmatpush.bf16.msra.mxu0 %v902
      %1032 = vmatpush.bf16.msra.mxu0 %v900
      %1033 = vmatpush.bf16.msra.mxu0 %v898
      %1034 = vmatpush.bf16.msra.mxu0 %v896
      %1035 = vmatpush.bf16.msra.mxu0 %v894
      %1036 = vmatpush.bf16.msra.mxu0 %v892
      %1037 = vmatmul.bf16.gmra.mxu0 %v711
      %v1038 = vpop.f32.mrf.mxu0
      %v1039 = vadd.f32 %v950, %v1038
      %v1040 = vpop.f32.mrf.mxu0
      %v1041 = vadd.f32 %v952, %v1040
      %1042 = vmatmul.bf16.gmra.mxu0 %v713
      %v1043 = vpop.f32.mrf.mxu0
      %v1044 = vadd.f32 %v955, %v1043
      %v1045 = vpop.f32.mrf.mxu0
      %v1046 = vadd.f32 %v957, %v1045
      %1047 = vmatmul.bf16.gmra.mxu0 %v715
      %v1048 = vpop.f32.mrf.mxu0
      %v1049 = vadd.f32 %v960, %v1048
      %v1050 = vpop.f32.mrf.mxu0
      %v1051 = vadd.f32 %v962, %v1050
      %1052 = vmatmul.bf16.gmra.mxu0 %v717
      %v1053 = vpop.f32.mrf.mxu0
      %v1054 = vadd.f32 %v965, %v1053
      %v1055 = vpop.f32.mrf.mxu0
      %v1056 = vadd.f32 %v967, %v1055
      %1057 = vmatmul.bf16.gmra.mxu0 %v719
      %v1058 = vpop.f32.mrf.mxu0
      %v1059 = vadd.f32 %v970, %v1058
      %v1060 = vpop.f32.mrf.mxu0
      %v1061 = vadd.f32 %v972, %v1060
      %1062 = vmatmul.bf16.gmra.mxu0 %v721
      %v1063 = vpop.f32.mrf.mxu0
      %v1064 = vadd.f32 %v975, %v1063
      %v1065 = vpop.f32.mrf.mxu0
      %v1066 = vadd.f32 %v977, %v1065
      %1067 = vmatmul.bf16.gmra.mxu0 %v723
      %v1068 = vpop.f32.mrf.mxu0
      %v1069 = vadd.f32 %v980, %v1068
      %v1070 = vpop.f32.mrf.mxu0
      %v1071 = vadd.f32 %v982, %v1070
      %1072 = vmatmul.bf16.gmra.mxu0 %v725
      %v1073 = vpop.f32.mrf.mxu0
      %v1074 = vadd.f32 %v985, %v1073
      %v1075 = vpop.f32.mrf.mxu0
      %v1076 = vadd.f32 %v987, %v1075
      %1077 = vmatmul.bf16.gmra.mxu0 %v727
      %v1078 = vpop.f32.mrf.mxu0
      %v1079 = vadd.f32 %v990, %v1078
      %v1080 = vpop.f32.mrf.mxu0
      %v1081 = vadd.f32 %v992, %v1080
      %1082 = vmatmul.bf16.gmra.mxu0 %v729
      %v1083 = vpop.f32.mrf.mxu0
      %v1084 = vadd.f32 %v995, %v1083
      %v1085 = vpop.f32.mrf.mxu0
      %v1086 = vadd.f32 %v997, %v1085
      %1087 = vmatmul.bf16.gmra.mxu0 %v731
      %v1088 = vpop.f32.mrf.mxu0
      %v1089 = vadd.f32 %v1000, %v1088
      %v1090 = vpop.f32.mrf.mxu0
      %v1091 = vadd.f32 %v1002, %v1090
      %1092 = vmatmul.bf16.gmra.mxu0 %v733
      %v1093 = vpop.f32.mrf.mxu0
      %v1094 = vadd.f32 %v1005, %v1093
      %v1095 = vpop.f32.mrf.mxu0
      %v1096 = vadd.f32 %v1007, %v1095
      %1097 = vmatmul.bf16.gmra.mxu0 %v735
      %v1098 = vpop.f32.mrf.mxu0
      %v1099 = vadd.f32 %v1010, %v1098
      %v1100 = vpop.f32.mrf.mxu0
      %v1101 = vadd.f32 %v1012, %v1100
      %1102 = vmatmul.bf16.gmra.mxu0 %v737
      %v1103 = vpop.f32.mrf.mxu0
      %v1104 = vadd.f32 %v1015, %v1103
      %v1105 = vpop.f32.mrf.mxu0
      %v1106 = vadd.f32 %v1017, %v1105
      %1107 = vmatmul.bf16.gmra.mxu0 %v739
      %v1108 = vpop.f32.mrf.mxu0
      %v1109 = vadd.f32 %v1020, %v1108
      %v1110 = vpop.f32.mrf.mxu0
      %v1111 = vadd.f32 %v1022, %v1110
      %1112 = vmatmul.bf16.gmra.mxu0 %v741
      %v1113 = vpop.f32.mrf.mxu0
      %v1114 = vadd.f32 %v1025, %v1113
      %v1115 = vpop.f32.mrf.mxu0
      %v1116 = vadd.f32 %v1027, %v1115
      %1117 = vdwg.mxu0
      %1118 = vmatpush.bf16.msra.mxu0 %v891
      %1119 = vmatpush.bf16.msra.mxu0 %v889
      %1120 = vmatpush.bf16.msra.mxu0 %v887
      %1121 = vmatpush.bf16.msra.mxu0 %v885
      %1122 = vmatpush.bf16.msra.mxu0 %v883
      %1123 = vmatpush.bf16.msra.mxu0 %v881
      %1124 = vmatpush.bf16.msra.mxu0 %v879
      %1125 = vmatpush.bf16.msra.mxu0 %v877
      %1126 = vmatmul.bf16.gmra.mxu0 %v710
      %v1127 = vpop.f32.mrf.mxu0
      %v1128 = vadd.f32 %v777, %v1127
      %v1129 = vpop.f32.mrf.mxu0
      %v1130 = vadd.f32 %v777, %v1129
      %1131 = vmatmul.bf16.gmra.mxu0 %v712
      %v1132 = vpop.f32.mrf.mxu0
      %v1133 = vadd.f32 %v777, %v1132
      %v1134 = vpop.f32.mrf.mxu0
      %v1135 = vadd.f32 %v777, %v1134
      %1136 = vmatmul.bf16.gmra.mxu0 %v714
      %v1137 = vpop.f32.mrf.mxu0
      %v1138 = vadd.f32 %v777, %v1137
      %v1139 = vpop.f32.mrf.mxu0
      %v1140 = vadd.f32 %v777, %v1139
      %1141 = vmatmul.bf16.gmra.mxu0 %v716
      %v1142 = vpop.f32.mrf.mxu0
      %v1143 = vadd.f32 %v777, %v1142
      %v1144 = vpop.f32.mrf.mxu0
      %v1145 = vadd.f32 %v777, %v1144
      %1146 = vmatmul.bf16.gmra.mxu0 %v718
      %v1147 = vpop.f32.mrf.mxu0
      %v1148 = vadd.f32 %v777, %v1147
      %v1149 = vpop.f32.mrf.mxu0
      %v1150 = vadd.f32 %v777, %v1149
      %1151 = vmatmul.bf16.gmra.mxu0 %v720
      %v1152 = vpop.f32.mrf.mxu0
      %v1153 = vadd.f32 %v777, %v1152
      %v1154 = vpop.f32.mrf.mxu0
      %v1155 = vadd.f32 %v777, %v1154
      %1156 = vmatmul.bf16.gmra.mxu0 %v722
      %v1157 = vpop.f32.mrf.mxu0
      %v1158 = vadd.f32 %v777, %v1157
      %v1159 = vpop.f32.mrf.mxu0
      %v1160 = vadd.f32 %v777, %v1159
      %1161 = vmatmul.bf16.gmra.mxu0 %v724
      %v1162 = vpop.f32.mrf.mxu0
      %v1163 = vadd.f32 %v777, %v1162
      %v1164 = vpop.f32.mrf.mxu0
      %v1165 = vadd.f32 %v777, %v1164
      %1166 = vmatmul.bf16.gmra.mxu0 %v726
      %v1167 = vpop.f32.mrf.mxu0
      %v1168 = vadd.f32 %v777, %v1167
      %v1169 = vpop.f32.mrf.mxu0
      %v1170 = vadd.f32 %v777, %v1169
      %1171 = vmatmul.bf16.gmra.mxu0 %v728
      %v1172 = vpop.f32.mrf.mxu0
      %v1173 = vadd.f32 %v777, %v1172
      %v1174 = vpop.f32.mrf.mxu0
      %v1175 = vadd.f32 %v777, %v1174
      %1176 = vmatmul.bf16.gmra.mxu0 %v730
      %v1177 = vpop.f32.mrf.mxu0
      %v1178 = vadd.f32 %v777, %v1177
      %v1179 = vpop.f32.mrf.mxu0
      %v1180 = vadd.f32 %v777, %v1179
      %1181 = vmatmul.bf16.gmra.mxu0 %v732
      %v1182 = vpop.f32.mrf.mxu0
      %v1183 = vadd.f32 %v777, %v1182
      %v1184 = vpop.f32.mrf.mxu0
      %v1185 = vadd.f32 %v777, %v1184
      %1186 = vmatmul.bf16.gmra.mxu0 %v734
      %v1187 = vpop.f32.mrf.mxu0
      %v1188 = vadd.f32 %v777, %v1187
      %v1189 = vpop.f32.mrf.mxu0
      %v1190 = vadd.f32 %v777, %v1189
      %1191 = vmatmul.bf16.gmra.mxu0 %v736
      %v1192 = vpop.f32.mrf.mxu0
      %v1193 = vadd.f32 %v777, %v1192
      %v1194 = vpop.f32.mrf.mxu0
      %v1195 = vadd.f32 %v777, %v1194
      %1196 = vmatmul.bf16.gmra.mxu0 %v738
      %v1197 = vpop.f32.mrf.mxu0
      %v1198 = vadd.f32 %v777, %v1197
      %v1199 = vpop.f32.mrf.mxu0
      %v1200 = vadd.f32 %v777, %v1199
      %1201 = vmatmul.bf16.gmra.mxu0 %v740
      %v1202 = vpop.f32.mrf.mxu0
      %v1203 = vadd.f32 %v777, %v1202
      %v1204 = vpop.f32.mrf.mxu0
      %v1205 = vadd.f32 %v777, %v1204
      %1206 = vdwg.mxu0
      %1207 = vmatpush.bf16.msra.mxu0 %v907
      %1208 = vmatpush.bf16.msra.mxu0 %v905
      %1209 = vmatpush.bf16.msra.mxu0 %v903
      %1210 = vmatpush.bf16.msra.mxu0 %v901
      %1211 = vmatpush.bf16.msra.mxu0 %v899
      %1212 = vmatpush.bf16.msra.mxu0 %v897
      %1213 = vmatpush.bf16.msra.mxu0 %v895
      %1214 = vmatpush.bf16.msra.mxu0 %v893
      %1215 = vmatmul.bf16.gmra.mxu0 %v711
      %v1216 = vpop.f32.mrf.mxu0
      %v1217 = vadd.f32 %v1128, %v1216
      %v1218 = vpop.f32.mrf.mxu0
      %v1219 = vadd.f32 %v1130, %v1218
      %1220 = vmatmul.bf16.gmra.mxu0 %v713
      %v1221 = vpop.f32.mrf.mxu0
      %v1222 = vadd.f32 %v1133, %v1221
      %v1223 = vpop.f32.mrf.mxu0
      %v1224 = vadd.f32 %v1135, %v1223
      %1225 = vmatmul.bf16.gmra.mxu0 %v715
      %v1226 = vpop.f32.mrf.mxu0
      %v1227 = vadd.f32 %v1138, %v1226
      %v1228 = vpop.f32.mrf.mxu0
      %v1229 = vadd.f32 %v1140, %v1228
      %1230 = vmatmul.bf16.gmra.mxu0 %v717
      %v1231 = vpop.f32.mrf.mxu0
      %v1232 = vadd.f32 %v1143, %v1231
      %v1233 = vpop.f32.mrf.mxu0
      %v1234 = vadd.f32 %v1145, %v1233
      %1235 = vmatmul.bf16.gmra.mxu0 %v719
      %v1236 = vpop.f32.mrf.mxu0
      %v1237 = vadd.f32 %v1148, %v1236
      %v1238 = vpop.f32.mrf.mxu0
      %v1239 = vadd.f32 %v1150, %v1238
      %1240 = vmatmul.bf16.gmra.mxu0 %v721
      %v1241 = vpop.f32.mrf.mxu0
      %v1242 = vadd.f32 %v1153, %v1241
      %v1243 = vpop.f32.mrf.mxu0
      %v1244 = vadd.f32 %v1155, %v1243
      %1245 = vmatmul.bf16.gmra.mxu0 %v723
      %v1246 = vpop.f32.mrf.mxu0
      %v1247 = vadd.f32 %v1158, %v1246
      %v1248 = vpop.f32.mrf.mxu0
      %v1249 = vadd.f32 %v1160, %v1248
      %1250 = vmatmul.bf16.gmra.mxu0 %v725
      %v1251 = vpop.f32.mrf.mxu0
      %v1252 = vadd.f32 %v1163, %v1251
      %v1253 = vpop.f32.mrf.mxu0
      %v1254 = vadd.f32 %v1165, %v1253
      %1255 = vmatmul.bf16.gmra.mxu0 %v727
      %v1256 = vpop.f32.mrf.mxu0
      %v1257 = vadd.f32 %v1168, %v1256
      %v1258 = vpop.f32.mrf.mxu0
      %v1259 = vadd.f32 %v1170, %v1258
      %1260 = vmatmul.bf16.gmra.mxu0 %v729
      %v1261 = vpop.f32.mrf.mxu0
      %v1262 = vadd.f32 %v1173, %v1261
      %v1263 = vpop.f32.mrf.mxu0
      %v1264 = vadd.f32 %v1175, %v1263
      %1265 = vmatmul.bf16.gmra.mxu0 %v731
      %v1266 = vpop.f32.mrf.mxu0
      %v1267 = vadd.f32 %v1178, %v1266
      %v1268 = vpop.f32.mrf.mxu0
      %v1269 = vadd.f32 %v1180, %v1268
      %1270 = vmatmul.bf16.gmra.mxu0 %v733
      %v1271 = vpop.f32.mrf.mxu0
      %v1272 = vadd.f32 %v1183, %v1271
      %v1273 = vpop.f32.mrf.mxu0
      %v1274 = vadd.f32 %v1185, %v1273
      %1275 = vmatmul.bf16.gmra.mxu0 %v735
      %v1276 = vpop.f32.mrf.mxu0
      %v1277 = vadd.f32 %v1188, %v1276
      %v1278 = vpop.f32.mrf.mxu0
      %v1279 = vadd.f32 %v1190, %v1278
      %1280 = vmatmul.bf16.gmra.mxu0 %v737
      %v1281 = vpop.f32.mrf.mxu0
      %v1282 = vadd.f32 %v1193, %v1281
      %v1283 = vpop.f32.mrf.mxu0
      %v1284 = vadd.f32 %v1195, %v1283
      %1285 = vmatmul.bf16.gmra.mxu0 %v739
      %v1286 = vpop.f32.mrf.mxu0
      %v1287 = vadd.f32 %v1198, %v1286
      %v1288 = vpop.f32.mrf.mxu0
      %v1289 = vadd.f32 %v1200, %v1288
      %1290 = vmatmul.bf16.gmra.mxu0 %v741
      %v1291 = vpop.f32.mrf.mxu0
      %v1292 = vadd.f32 %v1203, %v1291
      %v1293 = vpop.f32.mrf.mxu0
      %v1294 = vadd.f32 %v1205, %v1293
      %1295 = vdwg.mxu0
      %v1296 = vmax.f32 %v1039, 0.0
      %v1297 = vmax.f32 %v1217, 0.0
      %v1298 = vmax.f32 %v1041, 0.0
      %v1299 = vmax.f32 %v1219, 0.0
      %v1300 = vmax.f32 %v1044, 0.0
      %v1301 = vmax.f32 %v1222, 0.0
      %v1302 = vmax.f32 %v1046, 0.0
      %v1303 = vmax.f32 %v1224, 0.0
      %v1304 = vmax.f32 %v1049, 0.0
      %v1305 = vmax.f32 %v1227, 0.0
      %v1306 = vmax.f32 %v1051, 0.0
      %v1307 = vmax.f32 %v1229, 0.0
      %v1308 = vmax.f32 %v1054, 0.0
      %v1309 = vmax.f32 %v1232, 0.0
      %v1310 = vmax.f32 %v1056, 0.0
      %v1311 = vmax.f32 %v1234, 0.0
      %v1312 = vmax.f32 %v1059, 0.0
      %v1313 = vmax.f32 %v1237, 0.0
      %v1314 = vmax.f32 %v1061, 0.0
      %v1315 = vmax.f32 %v1239, 0.0
      %v1316 = vmax.f32 %v1064, 0.0
      %v1317 = vmax.f32 %v1242, 0.0
      %v1318 = vmax.f32 %v1066, 0.0
      %v1319 = vmax.f32 %v1244, 0.0
      %v1320 = vmax.f32 %v1069, 0.0
      %v1321 = vmax.f32 %v1247, 0.0
      %v1322 = vmax.f32 %v1071, 0.0
      %v1323 = vmax.f32 %v1249, 0.0
      %v1324 = vmax.f32 %v1074, 0.0
      %v1325 = vmax.f32 %v1252, 0.0
      %v1326 = vmax.f32 %v1076, 0.0
      %v1327 = vmax.f32 %v1254, 0.0
      %v1328 = vmax.f32 %v1079, 0.0
      %v1329 = vmax.f32 %v1257, 0.0
      %v1330 = vmax.f32 %v1081, 0.0
      %v1331 = vmax.f32 %v1259, 0.0
      %v1332 = vmax.f32 %v1084, 0.0
      %v1333 = vmax.f32 %v1262, 0.0
      %v1334 = vmax.f32 %v1086, 0.0
      %v1335 = vmax.f32 %v1264, 0.0
      %v1336 = vmax.f32 %v1089, 0.0
      %v1337 = vmax.f32 %v1267, 0.0
      %v1338 = vmax.f32 %v1091, 0.0
      %v1339 = vmax.f32 %v1269, 0.0
      %v1340 = vmax.f32 %v1094, 0.0
      %v1341 = vmax.f32 %v1272, 0.0
      %v1342 = vmax.f32 %v1096, 0.0
      %v1343 = vmax.f32 %v1274, 0.0
      %v1344 = vmax.f32 %v1099, 0.0
      %v1345 = vmax.f32 %v1277, 0.0
      %v1346 = vmax.f32 %v1101, 0.0
      %v1347 = vmax.f32 %v1279, 0.0
      %v1348 = vmax.f32 %v1104, 0.0
      %v1349 = vmax.f32 %v1282, 0.0
      %v1350 = vmax.f32 %v1106, 0.0
      %v1351 = vmax.f32 %v1284, 0.0
      %v1352 = vmax.f32 %v1109, 0.0
      %v1353 = vmax.f32 %v1287, 0.0
      %v1354 = vmax.f32 %v1111, 0.0
      %v1355 = vmax.f32 %v1289, 0.0
      %v1356 = vmax.f32 %v1114, 0.0
      %v1357 = vmax.f32 %v1292, 0.0
      %v1358 = vmax.f32 %v1116, 0.0
      %v1359 = vmax.f32 %v1294, 0.0
      %v1360 = vmax.f32 %v1296, %v1300
      %v1361 = vmax.f32 %v1360, %v1304
      %v1362 = vmax.f32 %v1361, %v1308
      %v1363 = vmax.f32 %v1362, %v1312
      %v1364 = vmax.f32 %v1363, %v1316
      %v1365 = vmax.f32 %v1364, %v1320
      %v1366 = vmax.f32 %v1365, %v1324
      %v1367 = vmax.f32 %v1366, %v1328
      %v1368 = vmax.f32 %v1367, %v1332
      %v1369 = vmax.f32 %v1368, %v1336
      %v1370 = vmax.f32 %v1369, %v1340
      %v1371 = vmax.f32 %v1370, %v1344
      %v1372 = vmax.f32 %v1371, %v1348
      %v1373 = vmax.f32 %v1372, %v1352
      %v1374 = vmax.f32 %v1373, %v1356
      %v1375 = vmax.f32 %v1297, %v1301
      %v1376 = vmax.f32 %v1375, %v1305
      %v1377 = vmax.f32 %v1376, %v1309
      %v1378 = vmax.f32 %v1377, %v1313
      %v1379 = vmax.f32 %v1378, %v1317
      %v1380 = vmax.f32 %v1379, %v1321
      %v1381 = vmax.f32 %v1380, %v1325
      %v1382 = vmax.f32 %v1381, %v1329
      %v1383 = vmax.f32 %v1382, %v1333
      %v1384 = vmax.f32 %v1383, %v1337
      %v1385 = vmax.f32 %v1384, %v1341
      %v1386 = vmax.f32 %v1385, %v1345
      %v1387 = vmax.f32 %v1386, %v1349
      %v1388 = vmax.f32 %v1387, %v1353
      %v1389 = vmax.f32 %v1388, %v1357
      %v1390 = vmax.f32 %v1298, %v1302
      %v1391 = vmax.f32 %v1390, %v1306
      %v1392 = vmax.f32 %v1391, %v1310
      %v1393 = vmax.f32 %v1392, %v1314
      %v1394 = vmax.f32 %v1393, %v1318
      %v1395 = vmax.f32 %v1394, %v1322
      %v1396 = vmax.f32 %v1395, %v1326
      %v1397 = vmax.f32 %v1396, %v1330
      %v1398 = vmax.f32 %v1397, %v1334
      %v1399 = vmax.f32 %v1398, %v1338
      %v1400 = vmax.f32 %v1399, %v1342
      %v1401 = vmax.f32 %v1400, %v1346
      %v1402 = vmax.f32 %v1401, %v1350
      %v1403 = vmax.f32 %v1402, %v1354
      %v1404 = vmax.f32 %v1403, %v1358
      %v1405 = vmax.f32 %v1299, %v1303
      %v1406 = vmax.f32 %v1405, %v1307
      %v1407 = vmax.f32 %v1406, %v1311
      %v1408 = vmax.f32 %v1407, %v1315
      %v1409 = vmax.f32 %v1408, %v1319
      %v1410 = vmax.f32 %v1409, %v1323
      %v1411 = vmax.f32 %v1410, %v1327
      %v1412 = vmax.f32 %v1411, %v1331
      %v1413 = vmax.f32 %v1412, %v1335
      %v1414 = vmax.f32 %v1413, %v1339
      %v1415 = vmax.f32 %v1414, %v1343
      %v1416 = vmax.f32 %v1415, %v1347
      %v1417 = vmax.f32 %v1416, %v1351
      %v1418 = vmax.f32 %v1417, %v1355
      %v1419 = vmax.f32 %v1418, %v1359
      %p1420 = scmp.eq.s32.totalorder %s23, 0
      // Predicated region
      $region41: #{tpu_custom_call.1} parent=39 // pred_check
        %p1421 = pneg %p1420
      $region42: #{tpu_custom_call.1} parent=39 // pred_check_branch
        %1423 = sbr.rel (%p1421) target = $region44
      $region43: #{tpu_custom_call.1} parent=39 // pred_region
        %1424 = vst [vmem:[#allocation2] sm:$0xff] 0.0
        %1425 = vst [vmem:[#allocation2 + $0x8] sm:$0xff] 0.0
        %1426 = vst [vmem:[#allocation2 + $0x10] sm:$0xff] 0.0
        %1427 = vst [vmem:[#allocation2 + $0x18] sm:$0xff] 0.0
      $region44: #{tpu_custom_call.1} parent=39 // pred_fallthru
        _
      %v1428 = vld [vmem:[#allocation2] sm:$0xff]
      %v1429 = vld [vmem:[#allocation2 + $0x8] sm:$0xff]
      %v1430 = vld [vmem:[#allocation2 + $0x10] sm:$0xff]
      %v1431 = vld [vmem:[#allocation2 + $0x18] sm:$0xff]
      %v1432 = vmax.f32 %v1428, %v1374
      %v1433 = vmax.f32 %v1429, %v1389
      %v1434 = vmax.f32 %v1430, %v1404
      %v1435 = vmax.f32 %v1431, %v1419
      %1436 = vst [vmem:[#allocation2] sm:$0xff] %v1432
      %1437 = vst [vmem:[#allocation2 + $0x8] sm:$0xff] %v1433
      %1438 = vst [vmem:[#allocation2 + $0x10] sm:$0xff] %v1434
      %1439 = vst [vmem:[#allocation2 + $0x18] sm:$0xff] %v1435
      // Predicated region
      $region45: #{tpu_custom_call.1} parent=39 // pred_check
        %p1440 = pneg %p1420
      $region46: #{tpu_custom_call.1} parent=39 // pred_check_branch
        %1442 = sbr.rel (%p1440) target = $region48
      $region47: #{tpu_custom_call.1} parent=39 // pred_region
        %v1443 = vld [vmem:[#allocation2] sm:$0xff]
        %v1444 = vld [vmem:[#allocation2 + $0x8] sm:$0xff]
        %v1445 = vld [vmem:[#allocation2 + $0x10] sm:$0xff]
        %v1446 = vld [vmem:[#allocation2 + $0x18] sm:$0xff]
        %1447 = vxpose.xlu0.b32.start [1/16] %v1443, 128
        %1448 = vxpose.xlu0.b32.cont [2/16] %v1445, 128
        %1449 = vxpose.xlu0.b32.cont [3/16] 0.0, 128
        %1450 = vxpose.xlu0.b32.cont [4/16] 0.0, 128
        %1451 = vxpose.xlu0.b32.cont [5/16] 0.0, 128
        %1452 = vxpose.xlu0.b32.cont [6/16] 0.0, 128
        %1453 = vxpose.xlu0.b32.cont [7/16] 0.0, 128
        %1454 = vxpose.xlu0.b32.cont [8/16] 0.0, 128
        %1455 = vxpose.xlu0.b32.cont [9/16] 0.0, 128
        %1456 = vxpose.xlu0.b32.cont [10/16] 0.0, 128
        %1457 = vxpose.xlu0.b32.cont [11/16] 0.0, 128
        %1458 = vxpose.xlu0.b32.cont [12/16] 0.0, 128
        %1459 = vxpose.xlu0.b32.cont [13/16] 0.0, 128
        %1460 = vxpose.xlu0.b32.cont [14/16] 0.0, 128
        %1461 = vxpose.xlu0.b32.cont [15/16] 0.0, 128
        %1462 = vxpose.xlu0.b32.end [16/16] 0.0, 128
        %v1463 = vpop.trf.xlu0
        %v1464 = vpop.trf.xlu0
        %v1465 = vpop.trf.xlu0
        %v1466 = vpop.trf.xlu0
        %v1467 = vpop.trf.xlu0
        %v1468 = vpop.trf.xlu0
        %v1469 = vpop.trf.xlu0
        %v1470 = vpop.trf.xlu0
        %v1471 = vpop.trf.xlu0
        %v1472 = vpop.trf.xlu0
        %v1473 = vpop.trf.xlu0
        %v1474 = vpop.trf.xlu0
        %v1475 = vpop.trf.xlu0
        %v1476 = vpop.trf.xlu0
        %v1477 = vpop.trf.xlu0
        %v1478 = vpop.trf.xlu0
        %1479 = vxpose.xlu0.b32.start [1/16] %v1444, 128
        %1480 = vxpose.xlu0.b32.cont [2/16] %v1446, 128
        %1481 = vxpose.xlu0.b32.cont [3/16] 0.0, 128
        %1482 = vxpose.xlu0.b32.cont [4/16] 0.0, 128
        %1483 = vxpose.xlu0.b32.cont [5/16] 0.0, 128
        %1484 = vxpose.xlu0.b32.cont [6/16] 0.0, 128
        %1485 = vxpose.xlu0.b32.cont [7/16] 0.0, 128
        %1486 = vxpose.xlu0.b32.cont [8/16] 0.0, 128
        %1487 = vxpose.xlu0.b32.cont [9/16] 0.0, 128
        %1488 = vxpose.xlu0.b32.cont [10/16] 0.0, 128
        %1489 = vxpose.xlu0.b32.cont [11/16] 0.0, 128
        %1490 = vxpose.xlu0.b32.cont [12/16] 0.0, 128
        %1491 = vxpose.xlu0.b32.cont [13/16] 0.0, 128
        %1492 = vxpose.xlu0.b32.cont [14/16] 0.0, 128
        %1493 = vxpose.xlu0.b32.cont [15/16] 0.0, 128
        %1494 = vxpose.xlu0.b32.end [16/16] 0.0, 128
        %v1495 = vpop.trf.xlu0
        %v1496 = vpop.trf.xlu0
        %v1497 = vpop.trf.xlu0
        %v1498 = vpop.trf.xlu0
        %v1499 = vpop.trf.xlu0
        %v1500 = vpop.trf.xlu0
        %v1501 = vpop.trf.xlu0
        %v1502 = vpop.trf.xlu0
        %v1503 = vpop.trf.xlu0
        %v1504 = vpop.trf.xlu0
        %v1505 = vpop.trf.xlu0
        %v1506 = vpop.trf.xlu0
        %v1507 = vpop.trf.xlu0
        %v1508 = vpop.trf.xlu0
        %v1509 = vpop.trf.xlu0
        %v1510 = vpop.trf.xlu0
        %vm1511 = vcmask 130048
        %1512 = vst.msk [vmem:[%s286] sm:$0xff] %vm1511, %v1463
        %1513 = vst.msk [vmem:[%s286 + $0x8] sm:$0xff] %vm1511, %v1464
        %1514 = vst.msk [vmem:[%s286 + $0x10] sm:$0xff] %vm1511, %v1465
        %1515 = vst.msk [vmem:[%s286 + $0x18] sm:$0xff] %vm1511, %v1466
        %1516 = vst.msk [vmem:[%s286 + $0x20] sm:$0xff] %vm1511, %v1467
        %1517 = vst.msk [vmem:[%s286 + $0x28] sm:$0xff] %vm1511, %v1468
        %1518 = vst.msk [vmem:[%s286 + $0x30] sm:$0xff] %vm1511, %v1469
        %1519 = vst.msk [vmem:[%s286 + $0x38] sm:$0xff] %vm1511, %v1470
        %1520 = vst.msk [vmem:[%s286 + $0x40] sm:$0xff] %vm1511, %v1471
        %1521 = vst.msk [vmem:[%s286 + $0x48] sm:$0xff] %vm1511, %v1472
        %1522 = vst.msk [vmem:[%s286 + $0x50] sm:$0xff] %vm1511, %v1473
        %1523 = vst.msk [vmem:[%s286 + $0x58] sm:$0xff] %vm1511, %v1474
        %1524 = vst.msk [vmem:[%s286 + $0x60] sm:$0xff] %vm1511, %v1475
        %1525 = vst.msk [vmem:[%s286 + $0x68] sm:$0xff] %vm1511, %v1476
        %1526 = vst.msk [vmem:[%s286 + $0x70] sm:$0xff] %vm1511, %v1477
        %1527 = vst.msk [vmem:[%s286 + $0x78] sm:$0xff] %vm1511, %v1478
        %1528 = vst.msk [vmem:[%s286 + $0x80] sm:$0xff] %vm1511, %v1495
        %1529 = vst.msk [vmem:[%s286 + $0x88] sm:$0xff] %vm1511, %v1496
        %1530 = vst.msk [vmem:[%s286 + $0x90] sm:$0xff] %vm1511, %v1497
        %1531 = vst.msk [vmem:[%s286 + $0x98] sm:$0xff] %vm1511, %v1498
        %1532 = vst.msk [vmem:[%s286 + $0xa0] sm:$0xff] %vm1511, %v1499
        %1533 = vst.msk [vmem:[%s286 + $0xa8] sm:$0xff] %vm1511, %v1500
        %1534 = vst.msk [vmem:[%s286 + $0xb0] sm:$0xff] %vm1511, %v1501
        %1535 = vst.msk [vmem:[%s286 + $0xb8] sm:$0xff] %vm1511, %v1502
        %1536 = vst.msk [vmem:[%s286 + $0xc0] sm:$0xff] %vm1511, %v1503
        %1537 = vst.msk [vmem:[%s286 + $0xc8] sm:$0xff] %vm1511, %v1504
        %1538 = vst.msk [vmem:[%s286 + $0xd0] sm:$0xff] %vm1511, %v1505
        %1539 = vst.msk [vmem:[%s286 + $0xd8] sm:$0xff] %vm1511, %v1506
        %1540 = vst.msk [vmem:[%s286 + $0xe0] sm:$0xff] %vm1511, %v1507
        %1541 = vst.msk [vmem:[%s286 + $0xe8] sm:$0xff] %vm1511, %v1508
        %1542 = vst.msk [vmem:[%s286 + $0xf0] sm:$0xff] %vm1511, %v1509
        %1543 = vst.msk [vmem:[%s286 + $0xf8] sm:$0xff] %vm1511, %v1510
      $region48: #{tpu_custom_call.1} parent=39 // pred_fallthru
        _
      %p1544 = scmp.lt.s32.totalorder %s21, 1
      %s1545 = scalar_select %p1544, %s21, 1
      %p1546 = scmp.lt.s32.totalorder %s22, 0
      %s1547 = scalar_select %p1546, %s22, 0
      %s1548 = smul.addr %s1545, 32
      %s1549 = sadd.s32 %s1547, %s1548
      %s1550 = smul.addr %s1549, 8
      %s1551 = scalar_lea.vmem %s5, %s1550
      // Predicated region
      $region49: #{tpu_custom_call.1} parent=39 // pred_check
        %p1552 = pneg %p169
      $region50: #{tpu_custom_call.1} parent=39 // pred_check_branch
        %1554 = sbr.rel (%p1552) target = $region52
      $region51: #{tpu_custom_call.1} parent=39 // pred_region
        _
      $region52: #{tpu_custom_call.1} parent=39 // pred_fallthru
        _
    $region40: #{tpu_custom_call.1} parent=5 // pred_fallthru
      _
    %p1555 = scmp.le.s32.totalorder 2, %s11
    // Predicated region
    $region53: #{tpu_custom_call.1} parent=5 // pred_check
      %p1556 = pneg %p1555
    $region54: #{tpu_custom_call.1} parent=5 // pred_check_branch
      %1558 = sbr.rel (%p1556) target = $region56
    $region55: #{tpu_custom_call.1} parent=5 // pred_region
      %s1559 = ssub.s32 %s11, 2
      // Predicated region
      $region57: #{tpu_custom_call.1} parent=55 // pred_check
        %p1560 = pneg %p175
      $region58: #{tpu_custom_call.1} parent=55 // pred_check_branch
        %1562 = sbr.rel (%p1560) target = $region60
      $region59: #{tpu_custom_call.1} parent=55 // pred_region
        %p1563 = scmp.lt.s32.totalorder %s24, 1
        %s1564 = scalar_select %p1563, %s24, 1
        %p1565 = scmp.lt.s32.totalorder %s25, 0
        %s1566 = scalar_select %p1565, %s25, 0
        %s1567 = smul.addr %s1564, 32
        %s1568 = sadd.s32 %s1566, %s1567
        %s1569 = smul.addr %s1568, 8
        %s1570 = scalar_lea.vmem %s5, %s1569
      $region60: #{tpu_custom_call.1} parent=55 // pred_fallthru
        _
    $region56: #{tpu_custom_call.1} parent=5 // pred_fallthru
      _
  $region6: #{tpu_custom_call.1} parent=0 // loop_footer
    %s15 = sadd.s32 1, %s11
  $region7: #{tpu_custom_call.1} parent=0 // loop_footer_branch
    %10 = sbr.rel target = $region3
  $region8: #{tpu_custom_call.1} parent=0 // loop_exit
    _

</llo_original>
